<compile_context>
chip_gen: v6e
topology: v6e:2x2x1
jax: 0.10.0
libtpu: 0.0.40
codegen_flags: <defaults>
</compile_context>

<pallas_src>
import functools

import jax
import jax.numpy as jnp
from jax.experimental import pallas as pl
from jax.experimental.pallas import tpu as pltpu

EPS = 1e-5  # torch.nn.LayerNorm default


def _layer_norm(x, gamma, beta):
    # x: (S, D) fp32; gamma/beta: (1, D) fp32
    mean = jnp.mean(x, axis=-1, keepdims=True)
    var = jnp.mean((x - mean) ** 2, axis=-1, keepdims=True)
    return (x - mean) * jax.lax.rsqrt(var + EPS) * gamma + beta


def residual_attention_block_kernel(
    x_ref,
    ln1_g_ref, ln1_b_ref,
    wqkv_t_ref, bqkv_ref,
    wo_t_ref, bo_ref,
    ln2_g_ref, ln2_b_ref,
    wfc_t_ref, bfc_ref,
    wproj_t_ref, bproj_ref,
    o_ref,
    *, n_head,
):
    x = x_ref[0]                      # (S, D) fp32
    s_len, d = x.shape
    hd = d // n_head
    scale = 1.0 / (hd ** 0.5)

    # ---- ln_1 (fp32) ----
    ln1 = _layer_norm(x, ln1_g_ref[...], ln1_b_ref[...])

    # ---- fused QKV projection: one (S,D) x (D,3D) bf16 matmul, fp32 accumulate ----
    qkv = jnp.dot(ln1.astype(jnp.bfloat16), wqkv_t_ref[...],
                  preferred_element_type=jnp.float32) + bqkv_ref[...]      # (S, 3D) f32
    q = (qkv[:, :d] * scale).astype(jnp.bfloat16)   # fold 1/sqrt(hd) into q once
    k = qkv[:, d:2 * d].astype(jnp.bfloat16)
    v = qkv[:, 2 * d:].astype(jnp.bfloat16)

    # ---- multi-head self-attention (attn_mask=None); accumulate output projection per head ----
    wo_t = wo_t_ref[...]                            # (D, D) bf16  (= Wo^T)
    attn = jnp.zeros((s_len, d), jnp.float32)
    for h in range(n_head):                         # static loop; accumulation bounds live ranges
        lo = h * hd
        qh = q[:, lo:lo + hd]
        kh = k[:, lo:lo + hd]
        vh = v[:, lo:lo + hd]
        # Q @ K^T without materializing a transpose (NT matmul on the MXU).
        s = jax.lax.dot_general(qh, kh, (((1,), (1,)), ((), ())),
                                preferred_element_type=jnp.float32)        # (S, S) f32
        s = s - jnp.max(s, axis=-1, keepdims=True)
        p = jnp.exp(s)                                                     # fp32 on EUP
        inv = pl.reciprocal(jnp.sum(p, axis=-1, keepdims=True), approx=True)
        pv = jnp.dot(p.astype(jnp.bfloat16), vh,
                     preferred_element_type=jnp.float32)                   # (S, hd) f32
        o_h = (pv * inv).astype(jnp.bfloat16)       # normalize the small (S,hd) tile, not (S,S)
        attn += jnp.dot(o_h, wo_t[lo:lo + hd, :],
                        preferred_element_type=jnp.float32)                # (S, D) f32
    attn = attn + bo_ref[...]

    x1 = x + attn                      # residual 1 (fp32)

    # ---- ln_2 + MLP (c_fc -> QuickGELU -> c_proj) ----
    ln2 = _layer_norm(x1, ln2_g_ref[...], ln2_b_ref[...])
    h1 = jnp.dot(ln2.astype(jnp.bfloat16), wfc_t_ref[...],
                 preferred_element_type=jnp.float32) + bfc_ref[...]        # (S, 4D) f32
    h1 = h1 * jax.nn.sigmoid(1.702 * h1)                                   # QuickGELU (fp32)
    h2 = jnp.dot(h1.astype(jnp.bfloat16), wproj_t_ref[...],
                 preferred_element_type=jnp.float32) + bproj_ref[...]      # (S, D) f32

    o_ref[0] = x1 + h2                 # residual 2


def prepare_kernel_params(params):
    """One-time: transpose weights to contraction-ready layout and cast matmul weights to bf16."""
    return {
        "ln1_g": params["ln1_g"], "ln1_b": params["ln1_b"],
        "wqkv_t": jnp.asarray(params["wqkv"].T, jnp.bfloat16),   # (D, 3D)
        "bqkv": params["bqkv"],
        "wo_t": jnp.asarray(params["wo"].T, jnp.bfloat16),       # (D, D)
        "bo": params["bo"],
        "ln2_g": params["ln2_g"], "ln2_b": params["ln2_b"],
        "wfc_t": jnp.asarray(params["wfc"].T, jnp.bfloat16),     # (D, 4D)
        "bfc": params["bfc"],
        "wproj_t": jnp.asarray(params["wproj"].T, jnp.bfloat16), # (4D, D)
        "bproj": params["bproj"],
    }


@functools.partial(jax.jit, static_argnames=("n_head",))
def residual_attention_block(x_sbd, kp, *, n_head):
    """x_sbd: (seq, batch, d_model) fp32 -> (seq, batch, d_model) fp32."""
    x = jnp.transpose(x_sbd, (1, 0, 2))   # (B, S, D); fused by surrounding jit
    B, S, D = x.shape

    def const_spec(shape):
        nd = len(shape)
        return pl.BlockSpec(shape, lambda b, _nd=nd: (0,) * _nd)

    arg_order = ("ln1_g", "ln1_b", "wqkv_t", "bqkv", "wo_t", "bo",
                 "ln2_g", "ln2_b", "wfc_t", "bfc", "wproj_t", "bproj")

    in_specs = [pl.BlockSpec((1, S, D), lambda b: (b, 0, 0))]
    in_specs += [const_spec(kp[name].shape) for name in arg_order]

    # Advisory cost estimate: fused QKV + per-head attn + out-proj + MLP.
    flops = B * (24 * S * D * D + 4 * S * S * D)
    transcendentals = B * (n_head * S * S + 4 * S * D)
    bytes_accessed = (2 * B * S * D * 4          # activations in + out (fp32)
                      + 12 * D * D * 2           # bf16 weights
                      + 13 * D * 4)              # biases + LN params (fp32)

    out = pl.pallas_call(
        functools.partial(residual_attention_block_kernel, n_head=n_head),
        out_shape=jax.ShapeDtypeStruct((B, S, D), x.dtype),
        grid=(B,),
        in_specs=in_specs,
        out_specs=pl.BlockSpec((1, S, D), lambda b: (b, 0, 0)),
        compiler_params=pltpu.CompilerParams(
            dimension_semantics=("parallel",),
            vmem_limit_bytes=48 * 1024 * 1024,
        ),
        cost_estimate=pl.CostEstimate(flops=flops,
                                      transcendentals=transcendentals,
                                      bytes_accessed=bytes_accessed),
    )(x, *(kp[name] for name in arg_order))
    return jnp.transpose(out, (1, 0, 2))   # back to (seq, batch, d_model)


def make_params(key, d_model):
    ks = jax.random.split(key, 8)
    scale = 0.02
    return {
        "ln1_g": jnp.ones((1, d_model), jnp.float32),
        "ln1_b": jnp.zeros((1, d_model), jnp.float32),
        "wqkv": scale * jax.random.normal(ks[0], (3 * d_model, d_model), jnp.float32),
        "bqkv": scale * jax.random.normal(ks[1], (1, 3 * d_model), jnp.float32),
        "wo": scale * jax.random.normal(ks[2], (d_model, d_model), jnp.float32),
        "bo": scale * jax.random.normal(ks[3], (1, d_model), jnp.float32),
        "ln2_g": jnp.ones((1, d_model), jnp.float32),
        "ln2_b": jnp.zeros((1, d_model), jnp.float32),
        "wfc": scale * jax.random.normal(ks[4], (4 * d_model, d_model), jnp.float32),
        "bfc": scale * jax.random.normal(ks[5], (1, 4 * d_model), jnp.float32),
        "wproj": scale * jax.random.normal(ks[6], (d_model, 4 * d_model), jnp.float32),
        "bproj": scale * jax.random.normal(ks[7], (1, d_model), jnp.float32),
    }


def reference_forward(x_sbd, p, n_head):
    """Pure-JAX fp32 reference mirroring PyTorch ResidualAttentionBlock (attn_mask=None)."""
    S, B, D = x_sbd.shape
    hd = D // n_head

    def ln(x, g, b):
        m = x.mean(-1, keepdims=True)
        v = ((x - m) ** 2).mean(-1, keepdims=True)
        return (x - m) / jnp.sqrt(v + EPS) * g + b

    ln1 = ln(x_sbd, p["ln1_g"][0], p["ln1_b"][0])
    qkv = ln1 @ p["wqkv"].T + p["bqkv"][0]
    q, k, v = jnp.split(qkv, 3, axis=-1)

    def split_heads(t):  # (S, B, D) -> (B, H, S, hd)
        return jnp.transpose(t.reshape(S, B, n_head, hd), (1, 2, 0, 3))

    qh, kh, vh = map(split_heads, (q, k, v))
    scores = jnp.einsum("bhqd,bhkd->bhqk", qh, kh) / jnp.sqrt(hd)
    probs = jax.nn.softmax(scores, axis=-1)
    o = jnp.einsum("bhqk,bhkd->bhqd", probs, vh)
    o = jnp.transpose(o, (2, 0, 1, 3)).reshape(S, B, D)
    attn = o @ p["wo"].T + p["bo"][0]
    x1 = x_sbd + attn
    ln2 = ln(x1, p["ln2_g"][0], p["ln2_b"][0])
    h = ln2 @ p["wfc"].T + p["bfc"][0]
    h = h * jax.nn.sigmoid(1.702 * h)
    h = h @ p["wproj"].T + p["bproj"][0]
    return x1 + h


if __name__ == "__main__":
    SEQ, BATCH, D_MODEL, N_HEAD = 8, 2, 32, 4
    key = jax.random.PRNGKey(0)
    kx, kp_key = jax.random.split(key)
    x = jax.random.normal(kx, (SEQ, BATCH, D_MODEL), jnp.float32)
    params = make_params(kp_key, D_MODEL)
    kernel_params = prepare_kernel_params(params)   # one-time transpose + bf16 cast

    out = residual_attention_block(x, kernel_params, n_head=N_HEAD)
    out = jax.block_until_ready(out)

    ref = reference_forward(x, params, N_HEAD)
    assert out.shape == (SEQ, BATCH, D_MODEL)
    # bf16 matmul inputs + approx reciprocal vs fp32 reference -> relaxed tolerance.
    assert jnp.allclose(out, ref, rtol=1e-2, atol=1e-2), "Pallas output mismatch vs JAX reference"

    print("KERNEL_OK")
</pallas_src>

<mosaic_0001>
module attributes {stable_mosaic.version = 11 : i64} {
  func.func @residual_attention_block_kernel(%arg0: i32, %arg1: memref<1x8x32xf32, #tpu.memory_space<vmem>>, %arg2: memref<1x32xf32, #tpu.memory_space<vmem>>, %arg3: memref<1x32xf32, #tpu.memory_space<vmem>>, %arg4: memref<32x96xbf16, #tpu.memory_space<vmem>>, %arg5: memref<1x96xf32, #tpu.memory_space<vmem>>, %arg6: memref<32x32xbf16, #tpu.memory_space<vmem>>, %arg7: memref<1x32xf32, #tpu.memory_space<vmem>>, %arg8: memref<1x32xf32, #tpu.memory_space<vmem>>, %arg9: memref<1x32xf32, #tpu.memory_space<vmem>>, %arg10: memref<32x128xbf16, #tpu.memory_space<vmem>>, %arg11: memref<1x128xf32, #tpu.memory_space<vmem>>, %arg12: memref<128x32xbf16, #tpu.memory_space<vmem>>, %arg13: memref<1x32xf32, #tpu.memory_space<vmem>>, %arg14: memref<1x8x32xf32, #tpu.memory_space<vmem>>) attributes {dimension_semantics = [#tpu.dimension_semantics<parallel>], iteration_bounds = array<i64: 2>, scalar_prefetch = 0 : i64, scratch_operands = 0 : i64, tpu.core_type = #tpu.core_type<tc>, window_params = [{transform_indices = @transform_0, window_bounds = array<i64: 1, 8, 32>}, {pipeline_mode = #tpu.pipeline_mode<synchronous>, transform_indices = @transform_1, window_bounds = array<i64: 1, 32>}, {pipeline_mode = #tpu.pipeline_mode<synchronous>, transform_indices = @transform_2, window_bounds = array<i64: 1, 32>}, {pipeline_mode = #tpu.pipeline_mode<synchronous>, transform_indices = @transform_3, window_bounds = array<i64: 32, 96>}, {pipeline_mode = #tpu.pipeline_mode<synchronous>, transform_indices = @transform_4, window_bounds = array<i64: 1, 96>}, {pipeline_mode = #tpu.pipeline_mode<synchronous>, transform_indices = @transform_5, window_bounds = array<i64: 32, 32>}, {pipeline_mode = #tpu.pipeline_mode<synchronous>, transform_indices = @transform_6, window_bounds = array<i64: 1, 32>}, {pipeline_mode = #tpu.pipeline_mode<synchronous>, transform_indices = @transform_7, window_bounds = array<i64: 1, 32>}, {pipeline_mode = #tpu.pipeline_mode<synchronous>, transform_indices = @transform_8, window_bounds = array<i64: 1, 32>}, {pipeline_mode = #tpu.pipeline_mode<synchronous>, transform_indices = @transform_9, window_bounds = array<i64: 32, 128>}, {pipeline_mode = #tpu.pipeline_mode<synchronous>, transform_indices = @transform_10, window_bounds = array<i64: 1, 128>}, {pipeline_mode = #tpu.pipeline_mode<synchronous>, transform_indices = @transform_11, window_bounds = array<i64: 128, 32>}, {pipeline_mode = #tpu.pipeline_mode<synchronous>, transform_indices = @transform_12, window_bounds = array<i64: 1, 32>}, {transform_indices = @transform_13, window_bounds = array<i64: 1, 8, 32>}]} {
    %c0 = arith.constant 0 : index
    %c0_0 = arith.constant 0 : index
    %c0_1 = arith.constant 0 : index
    %0 = vector.load %arg1[%c0, %c0_0, %c0_1] : memref<1x8x32xf32, #tpu.memory_space<vmem>>, vector<1x8x32xf32>
    %1 = vector.shape_cast %0 : vector<1x8x32xf32> to vector<8x32xf32>
    %c0_2 = arith.constant 0 : index
    %c0_3 = arith.constant 0 : index
    %2 = vector.load %arg2[%c0_2, %c0_3] : memref<1x32xf32, #tpu.memory_space<vmem>>, vector<1x32xf32>
    %c0_4 = arith.constant 0 : index
    %c0_5 = arith.constant 0 : index
    %3 = vector.load %arg3[%c0_4, %c0_5] : memref<1x32xf32, #tpu.memory_space<vmem>>, vector<1x32xf32>
    %cst = arith.constant dense<0.000000e+00> : vector<8xf32>
    %4 = vector.multi_reduction <add>, %1, %cst [1] : vector<8x32xf32> to vector<8xf32>
    %5 = vector.shape_cast %4 : vector<8xf32> to vector<8x1xf32>
    %cst_6 = arith.constant 3.200000e+01 : f32
    %6 = vector.broadcast %cst_6 : f32 to vector<8x1xf32>
    %7 = arith.divf %5, %6 : vector<8x1xf32>
    %8 = vector.broadcast %7 : vector<8x1xf32> to vector<8x32xf32>
    %9 = arith.subf %1, %8 : vector<8x32xf32>
    %10 = arith.mulf %9, %9 : vector<8x32xf32>
    %cst_7 = arith.constant dense<0.000000e+00> : vector<8xf32>
    %11 = vector.multi_reduction <add>, %10, %cst_7 [1] : vector<8x32xf32> to vector<8xf32>
    %12 = vector.shape_cast %11 : vector<8xf32> to vector<8x1xf32>
    %cst_8 = arith.constant 3.200000e+01 : f32
    %13 = vector.broadcast %cst_8 : f32 to vector<8x1xf32>
    %14 = arith.divf %12, %13 : vector<8x1xf32>
    %15 = vector.broadcast %7 : vector<8x1xf32> to vector<8x32xf32>
    %16 = arith.subf %1, %15 : vector<8x32xf32>
    %cst_9 = arith.constant 9.99999974E-6 : f32
    %17 = vector.broadcast %cst_9 : f32 to vector<8x1xf32>
    %18 = arith.addf %14, %17 : vector<8x1xf32>
    %19 = math.rsqrt %18 : vector<8x1xf32>
    %20 = vector.broadcast %19 : vector<8x1xf32> to vector<8x32xf32>
    %21 = arith.mulf %16, %20 : vector<8x32xf32>
    %22 = vector.broadcast %2 : vector<1x32xf32> to vector<8x32xf32>
    %23 = arith.mulf %21, %22 : vector<8x32xf32>
    %24 = vector.broadcast %3 : vector<1x32xf32> to vector<8x32xf32>
    %25 = arith.addf %23, %24 : vector<8x32xf32>
    %26 = arith.truncf %25 : vector<8x32xf32> to vector<8x32xbf16>
    %c0_10 = arith.constant 0 : index
    %c0_11 = arith.constant 0 : index
    %27 = vector.load %arg4[%c0_10, %c0_11] : memref<32x96xbf16, #tpu.memory_space<vmem>>, vector<32x96xbf16>
    %cst_12 = arith.constant dense<0.000000e+00> : vector<8x96xf32>
    %28 = tpu.matmul %26, %27, %cst_12 {dimension_numbers = #tpu.dot_dimension_numbers<[1], [0], [0], [1], [0, 0, 1, 1], [], []>} : vector<8x32xbf16>, vector<32x96xbf16>, vector<8x96xf32> -> vector<8x96xf32>
    %c0_13 = arith.constant 0 : index
    %c0_14 = arith.constant 0 : index
    %29 = vector.load %arg5[%c0_13, %c0_14] : memref<1x96xf32, #tpu.memory_space<vmem>>, vector<1x96xf32>
    %30 = vector.broadcast %29 : vector<1x96xf32> to vector<8x96xf32>
    %31 = arith.addf %28, %30 : vector<8x96xf32>
    %32 = vector.extract_strided_slice %31 {offsets = [0, 0], sizes = [8, 32], strides = [1, 1]} : vector<8x96xf32> to vector<8x32xf32>
    %cst_15 = arith.constant 0.353553385 : f32
    %33 = vector.broadcast %cst_15 : f32 to vector<8x32xf32>
    %34 = arith.mulf %32, %33 : vector<8x32xf32>
    %35 = arith.truncf %34 : vector<8x32xf32> to vector<8x32xbf16>
    %36 = vector.extract_strided_slice %31 {offsets = [0, 32], sizes = [8, 32], strides = [1, 1]} : vector<8x96xf32> to vector<8x32xf32>
    %37 = arith.truncf %36 : vector<8x32xf32> to vector<8x32xbf16>
    %38 = vector.extract_strided_slice %31 {offsets = [0, 64], sizes = [8, 32], strides = [1, 1]} : vector<8x96xf32> to vector<8x32xf32>
    %39 = arith.truncf %38 : vector<8x32xf32> to vector<8x32xbf16>
    %c0_16 = arith.constant 0 : index
    %c0_17 = arith.constant 0 : index
    %40 = vector.load %arg6[%c0_16, %c0_17] : memref<32x32xbf16, #tpu.memory_space<vmem>>, vector<32x32xbf16>
    %cst_18 = arith.constant 0.000000e+00 : f32
    %41 = vector.broadcast %cst_18 : f32 to vector<8x32xf32>
    %42 = vector.extract_strided_slice %35 {offsets = [0, 0], sizes = [8, 8], strides = [1, 1]} : vector<8x32xbf16> to vector<8x8xbf16>
    %43 = vector.extract_strided_slice %37 {offsets = [0, 0], sizes = [8, 8], strides = [1, 1]} : vector<8x32xbf16> to vector<8x8xbf16>
    %44 = vector.extract_strided_slice %39 {offsets = [0, 0], sizes = [8, 8], strides = [1, 1]} : vector<8x32xbf16> to vector<8x8xbf16>
    %cst_19 = arith.constant dense<0.000000e+00> : vector<8x8xf32>
    %45 = tpu.matmul %42, %43, %cst_19 {dimension_numbers = #tpu.dot_dimension_numbers<[1], [1], [0], [0], [0, 0, 1, 0], [], []>} : vector<8x8xbf16>, vector<8x8xbf16>, vector<8x8xf32> -> vector<8x8xf32>
    %cst_20 = arith.constant dense<0xFF800000> : vector<8xf32>
    %46 = vector.multi_reduction <maximumf>, %45, %cst_20 [1] : vector<8x8xf32> to vector<8xf32>
    %47 = vector.shape_cast %46 : vector<8xf32> to vector<8x1xf32>
    %48 = vector.broadcast %47 : vector<8x1xf32> to vector<8x8xf32>
    %49 = arith.subf %45, %48 : vector<8x8xf32>
    %50 = math.exp %49 : vector<8x8xf32>
    %cst_21 = arith.constant dense<0.000000e+00> : vector<8xf32>
    %51 = vector.multi_reduction <add>, %50, %cst_21 [1] : vector<8x8xf32> to vector<8xf32>
    %52 = vector.shape_cast %51 : vector<8xf32> to vector<8x1xf32>
    %53 = tpu.reciprocal %52 {approx = true} : vector<8x1xf32> -> vector<8x1xf32>
    %54 = arith.truncf %50 : vector<8x8xf32> to vector<8x8xbf16>
    %cst_22 = arith.constant dense<0.000000e+00> : vector<8x8xf32>
    %55 = tpu.matmul %54, %44, %cst_22 {dimension_numbers = #tpu.dot_dimension_numbers<[1], [0], [0], [1], [0, 0, 1, 1], [], []>} : vector<8x8xbf16>, vector<8x8xbf16>, vector<8x8xf32> -> vector<8x8xf32>
    %56 = vector.broadcast %53 : vector<8x1xf32> to vector<8x8xf32>
    %57 = arith.mulf %55, %56 : vector<8x8xf32>
    %58 = arith.truncf %57 : vector<8x8xf32> to vector<8x8xbf16>
    %59 = vector.extract_strided_slice %40 {offsets = [0, 0], sizes = [8, 32], strides = [1, 1]} : vector<32x32xbf16> to vector<8x32xbf16>
    %cst_23 = arith.constant dense<0.000000e+00> : vector<8x32xf32>
    %60 = tpu.matmul %58, %59, %cst_23 {dimension_numbers = #tpu.dot_dimension_numbers<[1], [0], [0], [1], [0, 0, 1, 1], [], []>} : vector<8x8xbf16>, vector<8x32xbf16>, vector<8x32xf32> -> vector<8x32xf32>
    %61 = arith.addf %41, %60 : vector<8x32xf32>
    %62 = vector.extract_strided_slice %35 {offsets = [0, 8], sizes = [8, 8], strides = [1, 1]} : vector<8x32xbf16> to vector<8x8xbf16>
    %63 = vector.extract_strided_slice %37 {offsets = [0, 8], sizes = [8, 8], strides = [1, 1]} : vector<8x32xbf16> to vector<8x8xbf16>
    %64 = vector.extract_strided_slice %39 {offsets = [0, 8], sizes = [8, 8], strides = [1, 1]} : vector<8x32xbf16> to vector<8x8xbf16>
    %cst_24 = arith.constant dense<0.000000e+00> : vector<8x8xf32>
    %65 = tpu.matmul %62, %63, %cst_24 {dimension_numbers = #tpu.dot_dimension_numbers<[1], [1], [0], [0], [0, 0, 1, 0], [], []>} : vector<8x8xbf16>, vector<8x8xbf16>, vector<8x8xf32> -> vector<8x8xf32>
    %cst_25 = arith.constant dense<0xFF800000> : vector<8xf32>
    %66 = vector.multi_reduction <maximumf>, %65, %cst_25 [1] : vector<8x8xf32> to vector<8xf32>
    %67 = vector.shape_cast %66 : vector<8xf32> to vector<8x1xf32>
    %68 = vector.broadcast %67 : vector<8x1xf32> to vector<8x8xf32>
    %69 = arith.subf %65, %68 : vector<8x8xf32>
    %70 = math.exp %69 : vector<8x8xf32>
    %cst_26 = arith.constant dense<0.000000e+00> : vector<8xf32>
    %71 = vector.multi_reduction <add>, %70, %cst_26 [1] : vector<8x8xf32> to vector<8xf32>
    %72 = vector.shape_cast %71 : vector<8xf32> to vector<8x1xf32>
    %73 = tpu.reciprocal %72 {approx = true} : vector<8x1xf32> -> vector<8x1xf32>
    %74 = arith.truncf %70 : vector<8x8xf32> to vector<8x8xbf16>
    %cst_27 = arith.constant dense<0.000000e+00> : vector<8x8xf32>
    %75 = tpu.matmul %74, %64, %cst_27 {dimension_numbers = #tpu.dot_dimension_numbers<[1], [0], [0], [1], [0, 0, 1, 1], [], []>} : vector<8x8xbf16>, vector<8x8xbf16>, vector<8x8xf32> -> vector<8x8xf32>
    %76 = vector.broadcast %73 : vector<8x1xf32> to vector<8x8xf32>
    %77 = arith.mulf %75, %76 : vector<8x8xf32>
    %78 = arith.truncf %77 : vector<8x8xf32> to vector<8x8xbf16>
    %79 = vector.extract_strided_slice %40 {offsets = [8, 0], sizes = [8, 32], strides = [1, 1]} : vector<32x32xbf16> to vector<8x32xbf16>
    %cst_28 = arith.constant dense<0.000000e+00> : vector<8x32xf32>
    %80 = tpu.matmul %78, %79, %cst_28 {dimension_numbers = #tpu.dot_dimension_numbers<[1], [0], [0], [1], [0, 0, 1, 1], [], []>} : vector<8x8xbf16>, vector<8x32xbf16>, vector<8x32xf32> -> vector<8x32xf32>
    %81 = arith.addf %61, %80 : vector<8x32xf32>
    %82 = vector.extract_strided_slice %35 {offsets = [0, 16], sizes = [8, 8], strides = [1, 1]} : vector<8x32xbf16> to vector<8x8xbf16>
    %83 = vector.extract_strided_slice %37 {offsets = [0, 16], sizes = [8, 8], strides = [1, 1]} : vector<8x32xbf16> to vector<8x8xbf16>
    %84 = vector.extract_strided_slice %39 {offsets = [0, 16], sizes = [8, 8], strides = [1, 1]} : vector<8x32xbf16> to vector<8x8xbf16>
    %cst_29 = arith.constant dense<0.000000e+00> : vector<8x8xf32>
    %85 = tpu.matmul %82, %83, %cst_29 {dimension_numbers = #tpu.dot_dimension_numbers<[1], [1], [0], [0], [0, 0, 1, 0], [], []>} : vector<8x8xbf16>, vector<8x8xbf16>, vector<8x8xf32> -> vector<8x8xf32>
    %cst_30 = arith.constant dense<0xFF800000> : vector<8xf32>
    %86 = vector.multi_reduction <maximumf>, %85, %cst_30 [1] : vector<8x8xf32> to vector<8xf32>
    %87 = vector.shape_cast %86 : vector<8xf32> to vector<8x1xf32>
    %88 = vector.broadcast %87 : vector<8x1xf32> to vector<8x8xf32>
    %89 = arith.subf %85, %88 : vector<8x8xf32>
    %90 = math.exp %89 : vector<8x8xf32>
    %cst_31 = arith.constant dense<0.000000e+00> : vector<8xf32>
    %91 = vector.multi_reduction <add>, %90, %cst_31 [1] : vector<8x8xf32> to vector<8xf32>
    %92 = vector.shape_cast %91 : vector<8xf32> to vector<8x1xf32>
    %93 = tpu.reciprocal %92 {approx = true} : vector<8x1xf32> -> vector<8x1xf32>
    %94 = arith.truncf %90 : vector<8x8xf32> to vector<8x8xbf16>
    %cst_32 = arith.constant dense<0.000000e+00> : vector<8x8xf32>
    %95 = tpu.matmul %94, %84, %cst_32 {dimension_numbers = #tpu.dot_dimension_numbers<[1], [0], [0], [1], [0, 0, 1, 1], [], []>} : vector<8x8xbf16>, vector<8x8xbf16>, vector<8x8xf32> -> vector<8x8xf32>
    %96 = vector.broadcast %93 : vector<8x1xf32> to vector<8x8xf32>
    %97 = arith.mulf %95, %96 : vector<8x8xf32>
    %98 = arith.truncf %97 : vector<8x8xf32> to vector<8x8xbf16>
    %99 = vector.extract_strided_slice %40 {offsets = [16, 0], sizes = [8, 32], strides = [1, 1]} : vector<32x32xbf16> to vector<8x32xbf16>
    %cst_33 = arith.constant dense<0.000000e+00> : vector<8x32xf32>
    %100 = tpu.matmul %98, %99, %cst_33 {dimension_numbers = #tpu.dot_dimension_numbers<[1], [0], [0], [1], [0, 0, 1, 1], [], []>} : vector<8x8xbf16>, vector<8x32xbf16>, vector<8x32xf32> -> vector<8x32xf32>
    %101 = arith.addf %81, %100 : vector<8x32xf32>
    %102 = vector.extract_strided_slice %35 {offsets = [0, 24], sizes = [8, 8], strides = [1, 1]} : vector<8x32xbf16> to vector<8x8xbf16>
    %103 = vector.extract_strided_slice %37 {offsets = [0, 24], sizes = [8, 8], strides = [1, 1]} : vector<8x32xbf16> to vector<8x8xbf16>
    %104 = vector.extract_strided_slice %39 {offsets = [0, 24], sizes = [8, 8], strides = [1, 1]} : vector<8x32xbf16> to vector<8x8xbf16>
    %cst_34 = arith.constant dense<0.000000e+00> : vector<8x8xf32>
    %105 = tpu.matmul %102, %103, %cst_34 {dimension_numbers = #tpu.dot_dimension_numbers<[1], [1], [0], [0], [0, 0, 1, 0], [], []>} : vector<8x8xbf16>, vector<8x8xbf16>, vector<8x8xf32> -> vector<8x8xf32>
    %cst_35 = arith.constant dense<0xFF800000> : vector<8xf32>
    %106 = vector.multi_reduction <maximumf>, %105, %cst_35 [1] : vector<8x8xf32> to vector<8xf32>
    %107 = vector.shape_cast %106 : vector<8xf32> to vector<8x1xf32>
    %108 = vector.broadcast %107 : vector<8x1xf32> to vector<8x8xf32>
    %109 = arith.subf %105, %108 : vector<8x8xf32>
    %110 = math.exp %109 : vector<8x8xf32>
    %cst_36 = arith.constant dense<0.000000e+00> : vector<8xf32>
    %111 = vector.multi_reduction <add>, %110, %cst_36 [1] : vector<8x8xf32> to vector<8xf32>
    %112 = vector.shape_cast %111 : vector<8xf32> to vector<8x1xf32>
    %113 = tpu.reciprocal %112 {approx = true} : vector<8x1xf32> -> vector<8x1xf32>
    %114 = arith.truncf %110 : vector<8x8xf32> to vector<8x8xbf16>
    %cst_37 = arith.constant dense<0.000000e+00> : vector<8x8xf32>
    %115 = tpu.matmul %114, %104, %cst_37 {dimension_numbers = #tpu.dot_dimension_numbers<[1], [0], [0], [1], [0, 0, 1, 1], [], []>} : vector<8x8xbf16>, vector<8x8xbf16>, vector<8x8xf32> -> vector<8x8xf32>
    %116 = vector.broadcast %113 : vector<8x1xf32> to vector<8x8xf32>
    %117 = arith.mulf %115, %116 : vector<8x8xf32>
    %118 = arith.truncf %117 : vector<8x8xf32> to vector<8x8xbf16>
    %119 = vector.extract_strided_slice %40 {offsets = [24, 0], sizes = [8, 32], strides = [1, 1]} : vector<32x32xbf16> to vector<8x32xbf16>
    %cst_38 = arith.constant dense<0.000000e+00> : vector<8x32xf32>
    %120 = tpu.matmul %118, %119, %cst_38 {dimension_numbers = #tpu.dot_dimension_numbers<[1], [0], [0], [1], [0, 0, 1, 1], [], []>} : vector<8x8xbf16>, vector<8x32xbf16>, vector<8x32xf32> -> vector<8x32xf32>
    %121 = arith.addf %101, %120 : vector<8x32xf32>
    %c0_39 = arith.constant 0 : index
    %c0_40 = arith.constant 0 : index
    %122 = vector.load %arg7[%c0_39, %c0_40] : memref<1x32xf32, #tpu.memory_space<vmem>>, vector<1x32xf32>
    %123 = vector.broadcast %122 : vector<1x32xf32> to vector<8x32xf32>
    %124 = arith.addf %121, %123 : vector<8x32xf32>
    %125 = arith.addf %1, %124 : vector<8x32xf32>
    %c0_41 = arith.constant 0 : index
    %c0_42 = arith.constant 0 : index
    %126 = vector.load %arg8[%c0_41, %c0_42] : memref<1x32xf32, #tpu.memory_space<vmem>>, vector<1x32xf32>
    %c0_43 = arith.constant 0 : index
    %c0_44 = arith.constant 0 : index
    %127 = vector.load %arg9[%c0_43, %c0_44] : memref<1x32xf32, #tpu.memory_space<vmem>>, vector<1x32xf32>
    %cst_45 = arith.constant dense<0.000000e+00> : vector<8xf32>
    %128 = vector.multi_reduction <add>, %125, %cst_45 [1] : vector<8x32xf32> to vector<8xf32>
    %129 = vector.shape_cast %128 : vector<8xf32> to vector<8x1xf32>
    %cst_46 = arith.constant 3.200000e+01 : f32
    %130 = vector.broadcast %cst_46 : f32 to vector<8x1xf32>
    %131 = arith.divf %129, %130 : vector<8x1xf32>
    %132 = vector.broadcast %131 : vector<8x1xf32> to vector<8x32xf32>
    %133 = arith.subf %125, %132 : vector<8x32xf32>
    %134 = arith.mulf %133, %133 : vector<8x32xf32>
    %cst_47 = arith.constant dense<0.000000e+00> : vector<8xf32>
    %135 = vector.multi_reduction <add>, %134, %cst_47 [1] : vector<8x32xf32> to vector<8xf32>
    %136 = vector.shape_cast %135 : vector<8xf32> to vector<8x1xf32>
    %cst_48 = arith.constant 3.200000e+01 : f32
    %137 = vector.broadcast %cst_48 : f32 to vector<8x1xf32>
    %138 = arith.divf %136, %137 : vector<8x1xf32>
    %139 = vector.broadcast %131 : vector<8x1xf32> to vector<8x32xf32>
    %140 = arith.subf %125, %139 : vector<8x32xf32>
    %cst_49 = arith.constant 9.99999974E-6 : f32
    %141 = vector.broadcast %cst_49 : f32 to vector<8x1xf32>
    %142 = arith.addf %138, %141 : vector<8x1xf32>
    %143 = math.rsqrt %142 : vector<8x1xf32>
    %144 = vector.broadcast %143 : vector<8x1xf32> to vector<8x32xf32>
    %145 = arith.mulf %140, %144 : vector<8x32xf32>
    %146 = vector.broadcast %126 : vector<1x32xf32> to vector<8x32xf32>
    %147 = arith.mulf %145, %146 : vector<8x32xf32>
    %148 = vector.broadcast %127 : vector<1x32xf32> to vector<8x32xf32>
    %149 = arith.addf %147, %148 : vector<8x32xf32>
    %150 = arith.truncf %149 : vector<8x32xf32> to vector<8x32xbf16>
    %c0_50 = arith.constant 0 : index
    %c0_51 = arith.constant 0 : index
    %151 = vector.load %arg10[%c0_50, %c0_51] : memref<32x128xbf16, #tpu.memory_space<vmem>>, vector<32x128xbf16>
    %cst_52 = arith.constant dense<0.000000e+00> : vector<8x128xf32>
    %152 = tpu.matmul %150, %151, %cst_52 {dimension_numbers = #tpu.dot_dimension_numbers<[1], [0], [0], [1], [0, 0, 1, 1], [], []>} : vector<8x32xbf16>, vector<32x128xbf16>, vector<8x128xf32> -> vector<8x128xf32>
    %c0_53 = arith.constant 0 : index
    %c0_54 = arith.constant 0 : index
    %153 = vector.load %arg11[%c0_53, %c0_54] : memref<1x128xf32, #tpu.memory_space<vmem>>, vector<1x128xf32>
    %154 = vector.broadcast %153 : vector<1x128xf32> to vector<8x128xf32>
    %155 = arith.addf %152, %154 : vector<8x128xf32>
    %cst_55 = arith.constant 1.702000e+00 : f32
    %156 = vector.broadcast %cst_55 : f32 to vector<8x128xf32>
    %157 = arith.mulf %156, %155 : vector<8x128xf32>
    %158 = arith.negf %157 : vector<8x128xf32>
    %159 = math.exp %158 : vector<8x128xf32>
    %cst_56 = arith.constant 1.000000e+00 : f32
    %160 = vector.broadcast %cst_56 : f32 to vector<8x128xf32>
    %161 = arith.addf %160, %159 : vector<8x128xf32>
    %162 = arith.divf %160, %161 : vector<8x128xf32>
    %163 = arith.mulf %155, %162 : vector<8x128xf32>
    %164 = arith.truncf %163 : vector<8x128xf32> to vector<8x128xbf16>
    %c0_57 = arith.constant 0 : index
    %c0_58 = arith.constant 0 : index
    %165 = vector.load %arg12[%c0_57, %c0_58] : memref<128x32xbf16, #tpu.memory_space<vmem>>, vector<128x32xbf16>
    %cst_59 = arith.constant dense<0.000000e+00> : vector<8x32xf32>
    %166 = tpu.matmul %164, %165, %cst_59 {dimension_numbers = #tpu.dot_dimension_numbers<[1], [0], [0], [1], [0, 0, 1, 1], [], []>} : vector<8x128xbf16>, vector<128x32xbf16>, vector<8x32xf32> -> vector<8x32xf32>
    %c0_60 = arith.constant 0 : index
    %c0_61 = arith.constant 0 : index
    %167 = vector.load %arg13[%c0_60, %c0_61] : memref<1x32xf32, #tpu.memory_space<vmem>>, vector<1x32xf32>
    %168 = vector.broadcast %167 : vector<1x32xf32> to vector<8x32xf32>
    %169 = arith.addf %166, %168 : vector<8x32xf32>
    %170 = arith.addf %125, %169 : vector<8x32xf32>
    %c0_62 = arith.constant 0 : index
    %c0_63 = arith.constant 0 : index
    %c0_64 = arith.constant 0 : index
    %171 = vector.load %arg14[%c0_62, %c0_63, %c0_64] : memref<1x8x32xf32, #tpu.memory_space<vmem>>, vector<1x8x32xf32>
    %172 = vector.shape_cast %171 : vector<1x8x32xf32> to vector<8x32xf32>
    %173 = vector.shape_cast %170 : vector<8x32xf32> to vector<1x8x32xf32>
    tpu.vector_store %arg14[%c0_62, %c0_63, %c0_64], %173 {strides = array<i32>} : memref<1x8x32xf32, #tpu.memory_space<vmem>>, vector<1x8x32xf32>,
    return
  }
  func.func @transform_0(%arg0: i32) -> (i32, i32, i32) {
    %c0_i32 = arith.constant 0 : i32
    %c0_i32_0 = arith.constant 0 : i32
    %c0_i32_1 = arith.constant 0 : i32
    return %arg0, %c0_i32, %c0_i32_0 : i32, i32, i32
  }
  func.func @transform_1(%arg0: i32) -> (i32, i32) {
    %c0_i32 = arith.constant 0 : i32
    %c0_i32_0 = arith.constant 0 : i32
    %c0_i32_1 = arith.constant 0 : i32
    return %c0_i32, %c0_i32_0 : i32, i32
  }
  func.func @transform_2(%arg0: i32) -> (i32, i32) {
    %c0_i32 = arith.constant 0 : i32
    %c0_i32_0 = arith.constant 0 : i32
    %c0_i32_1 = arith.constant 0 : i32
    return %c0_i32, %c0_i32_0 : i32, i32
  }
  func.func @transform_3(%arg0: i32) -> (i32, i32) {
    %c0_i32 = arith.constant 0 : i32
    %c0_i32_0 = arith.constant 0 : i32
    %c0_i32_1 = arith.constant 0 : i32
    return %c0_i32, %c0_i32_0 : i32, i32
  }
  func.func @transform_4(%arg0: i32) -> (i32, i32) {
    %c0_i32 = arith.constant 0 : i32
    %c0_i32_0 = arith.constant 0 : i32
    %c0_i32_1 = arith.constant 0 : i32
    return %c0_i32, %c0_i32_0 : i32, i32
  }
  func.func @transform_5(%arg0: i32) -> (i32, i32) {
    %c0_i32 = arith.constant 0 : i32
    %c0_i32_0 = arith.constant 0 : i32
    %c0_i32_1 = arith.constant 0 : i32
    return %c0_i32, %c0_i32_0 : i32, i32
  }
  func.func @transform_6(%arg0: i32) -> (i32, i32) {
    %c0_i32 = arith.constant 0 : i32
    %c0_i32_0 = arith.constant 0 : i32
    %c0_i32_1 = arith.constant 0 : i32
    return %c0_i32, %c0_i32_0 : i32, i32
  }
  func.func @transform_7(%arg0: i32) -> (i32, i32) {
    %c0_i32 = arith.constant 0 : i32
    %c0_i32_0 = arith.constant 0 : i32
    %c0_i32_1 = arith.constant 0 : i32
    return %c0_i32, %c0_i32_0 : i32, i32
  }
  func.func @transform_8(%arg0: i32) -> (i32, i32) {
    %c0_i32 = arith.constant 0 : i32
    %c0_i32_0 = arith.constant 0 : i32
    %c0_i32_1 = arith.constant 0 : i32
    return %c0_i32, %c0_i32_0 : i32, i32
  }
  func.func @transform_9(%arg0: i32) -> (i32, i32) {
    %c0_i32 = arith.constant 0 : i32
    %c0_i32_0 = arith.constant 0 : i32
    %c0_i32_1 = arith.constant 0 : i32
    return %c0_i32, %c0_i32_0 : i32, i32
  }
  func.func @transform_10(%arg0: i32) -> (i32, i32) {
    %c0_i32 = arith.constant 0 : i32
    %c0_i32_0 = arith.constant 0 : i32
    %c0_i32_1 = arith.constant 0 : i32
    return %c0_i32, %c0_i32_0 : i32, i32
  }
  func.func @transform_11(%arg0: i32) -> (i32, i32) {
    %c0_i32 = arith.constant 0 : i32
    %c0_i32_0 = arith.constant 0 : i32
    %c0_i32_1 = arith.constant 0 : i32
    return %c0_i32, %c0_i32_0 : i32, i32
  }
  func.func @transform_12(%arg0: i32) -> (i32, i32) {
    %c0_i32 = arith.constant 0 : i32
    %c0_i32_0 = arith.constant 0 : i32
    %c0_i32_1 = arith.constant 0 : i32
    return %c0_i32, %c0_i32_0 : i32, i32
  }
  func.func @transform_13(%arg0: i32) -> (i32, i32, i32) {
    %c0_i32 = arith.constant 0 : i32
    %c0_i32_0 = arith.constant 0 : i32
    %c0_i32_1 = arith.constant 0 : i32
    return %arg0, %c0_i32, %c0_i32_0 : i32, i32, i32
  }
}

</mosaic_0001>

<llo_original>
// kernel: residual_attention_block.1
$region0: #{residual_attention_block.1}
  #allocation0 [shape = 'u32[]', space=smem, size = 0x4, offset = 0x4, fixed_abs, tag = 'smem constant byte address 0x4 - core index']
  #allocation1 [shape = 'u32[144,128]{1,0:T(1,128)}', space=vmem, size = 0x12000, scoped, tag = 'internal scratch']
  %s0 = inlined_call_operand.vmem [shape: f32[2,8,32], index: 0, kind: input, shape index: {}]
  %s1 = inlined_call_operand.vmem [shape: f32[1,32], index: 1, kind: input, shape index: {}]
  %s2 = inlined_call_operand.vmem [shape: f32[1,32], index: 2, kind: input, shape index: {}]
  %s3 = inlined_call_operand.vmem [shape: bf16[32,96], index: 3, kind: input, shape index: {}]
  %s4 = inlined_call_operand.vmem [shape: f32[1,96], index: 4, kind: input, shape index: {}]
  %s5 = inlined_call_operand.vmem [shape: bf16[32,32], index: 5, kind: input, shape index: {}]
  %s6 = inlined_call_operand.vmem [shape: f32[1,32], index: 6, kind: input, shape index: {}]
  %s7 = inlined_call_operand.vmem [shape: f32[1,32], index: 7, kind: input, shape index: {}]
  %s8 = inlined_call_operand.vmem [shape: f32[1,32], index: 8, kind: input, shape index: {}]
  %s9 = inlined_call_operand.vmem [shape: bf16[32,128], index: 9, kind: input, shape index: {}]
  %s10 = inlined_call_operand.vmem [shape: f32[1,128], index: 10, kind: input, shape index: {}]
  %s11 = inlined_call_operand.vmem [shape: bf16[128,32], index: 11, kind: input, shape index: {}]
  %s12 = inlined_call_operand.vmem [shape: f32[1,32], index: 12, kind: input, shape index: {}]
  %s13 = inlined_call_operand.vmem [shape: f32[2,8,32], index: 13, kind: output, shape index: {}]
  %s14 = sld [smem:[#allocation0]]
  $region85: #{residual_attention_block.1} parent=0
    _
  %s16 = ssub.s32 1, %s14
  %s17 = scalar_select 0, %s16, %s14
  loop: start=0, step=1, limit=4
  $region2: #{residual_attention_block.1} parent=0 // loop_pre_header
    _
  $region3: #{residual_attention_block.1} parent=0 // loop_header
    %s19 = sphi 0, %s23
    %p20 = scmp.ge.s32.totalorder %s19, 4
    %s29 = sphi 0, %s31
    %s32 = sphi 0, %s29
    %s33 = sphi 0, %s32
    %s49 = sphi 0, %s33
    %s53 = sphi 0, %s53
    %s55 = sphi 0, %s53
    %s56 = sphi 0, %s55
    %s70 = sphi 0, %s56
    %s74 = sphi 0, %s74
    %s76 = sphi 0, %s74
    %s77 = sphi 0, %s76
    %s91 = sphi 0, %s77
    %s95 = sphi 0, %s95
    %s97 = sphi 0, %s95
    %s98 = sphi 0, %s97
    %s112 = sphi 0, %s98
    %s116 = sphi 0, %s116
    %s118 = sphi 0, %s116
    %s119 = sphi 0, %s118
    %s133 = sphi 0, %s119
    %s137 = sphi 0, %s137
    %s139 = sphi 0, %s137
    %s140 = sphi 0, %s139
    %s154 = sphi 0, %s140
    %s158 = sphi 0, %s158
    %s160 = sphi 0, %s158
    %s161 = sphi 0, %s160
    %s175 = sphi 0, %s161
    %s179 = sphi 0, %s179
    %s181 = sphi 0, %s179
    %s182 = sphi 0, %s181
    %s196 = sphi 0, %s182
    %s200 = sphi 0, %s200
    %s202 = sphi 0, %s200
    %s203 = sphi 0, %s202
    %s217 = sphi 0, %s203
    %s221 = sphi 0, %s221
    %s223 = sphi 0, %s221
    %s224 = sphi 0, %s223
    %s238 = sphi 0, %s224
    %s242 = sphi 0, %s242
    %s244 = sphi 0, %s242
    %s245 = sphi 0, %s244
    %s259 = sphi 0, %s245
    %s263 = sphi 0, %s263
    %s265 = sphi 0, %s263
    %s266 = sphi 0, %s265
    %s280 = sphi 0, %s266
    %s284 = sphi 0, %s284
    %s286 = sphi 0, %s284
    %s287 = sphi 0, %s286
    %s301 = sphi 0, %s287
    %s307 = sphi 0, %s309
    %s310 = sphi 0, %s307
    %s311 = sphi 0, %s310
    %s327 = sphi 0, %s311
  $region4: #{residual_attention_block.1} parent=0 // loop_header_branch
    %22 = sbr.rel (%p20) target = $region8
  $region5: #{residual_attention_block.1} parent=0 // loop_body
    %s24 = ssub.s32 %s19, 1
    %s25 = ssub.s32 %s19, 2
    %s26 = sadd.s32 %s19, 1
    %s27 = ssub.s32 %s19, %s26
    %p28 = scmp.eq.s32.totalorder %s27, 0
    %s30 = sadd.s32 %s29, 1
    %s31 = scalar_select %p28, %s29, %s30
    %p34 = pneg %p28
    %p35 = scmp.eq.s32.totalorder %s19, 1
    %p36 = por %p34, %p35
    %p37 = scmp.ne.s32.totalorder %s29, %s32
    %p38 = scmp.eq.s32.totalorder %s19, 0
    %p39 = por %p37, %p38
    %p40 = scmp.ne.s32.totalorder %s29, %s32
    %p41 = scmp.eq.s32.totalorder %s24, 1
    %p42 = por %p40, %p41
    %p43 = scmp.ne.s32.totalorder %s32, %s33
    %p44 = scmp.eq.s32.totalorder %s24, 0
    %p45 = por %p43, %p44
    %p46 = scmp.ne.s32.totalorder %s32, %s33
    %p47 = scmp.eq.s32.totalorder %s25, 1
    %p48 = por %p46, %p47
    %p50 = scmp.ne.s32.totalorder %s33, %s49
    %p51 = scmp.eq.s32.totalorder %s25, 0
    %p52 = por %p50, %p51
    %s54 = sadd.s32 %s53, 1
    %p57 = scmp.eq.s32.totalorder %s19, 1
    %p58 = scmp.ne.s32.totalorder %s53, %s55
    %p59 = scmp.eq.s32.totalorder %s19, 0
    %p60 = por %p58, %p59
    %p61 = scmp.ne.s32.totalorder %s53, %s55
    %p62 = scmp.eq.s32.totalorder %s24, 1
    %p63 = por %p61, %p62
    %p64 = scmp.ne.s32.totalorder %s55, %s56
    %p65 = scmp.eq.s32.totalorder %s24, 0
    %p66 = por %p64, %p65
    %p67 = scmp.ne.s32.totalorder %s55, %s56
    %p68 = scmp.eq.s32.totalorder %s25, 1
    %p69 = por %p67, %p68
    %p71 = scmp.ne.s32.totalorder %s56, %s70
    %p72 = scmp.eq.s32.totalorder %s25, 0
    %p73 = por %p71, %p72
    %s75 = sadd.s32 %s74, 1
    %p78 = scmp.eq.s32.totalorder %s19, 1
    %p79 = scmp.ne.s32.totalorder %s74, %s76
    %p80 = scmp.eq.s32.totalorder %s19, 0
    %p81 = por %p79, %p80
    %p82 = scmp.ne.s32.totalorder %s74, %s76
    %p83 = scmp.eq.s32.totalorder %s24, 1
    %p84 = por %p82, %p83
    %p85 = scmp.ne.s32.totalorder %s76, %s77
    %p86 = scmp.eq.s32.totalorder %s24, 0
    %p87 = por %p85, %p86
    %p88 = scmp.ne.s32.totalorder %s76, %s77
    %p89 = scmp.eq.s32.totalorder %s25, 1
    %p90 = por %p88, %p89
    %p92 = scmp.ne.s32.totalorder %s77, %s91
    %p93 = scmp.eq.s32.totalorder %s25, 0
    %p94 = por %p92, %p93
    %s96 = sadd.s32 %s95, 1
    %p99 = scmp.eq.s32.totalorder %s19, 1
    %p100 = scmp.ne.s32.totalorder %s95, %s97
    %p101 = scmp.eq.s32.totalorder %s19, 0
    %p102 = por %p100, %p101
    %p103 = scmp.ne.s32.totalorder %s95, %s97
    %p104 = scmp.eq.s32.totalorder %s24, 1
    %p105 = por %p103, %p104
    %p106 = scmp.ne.s32.totalorder %s97, %s98
    %p107 = scmp.eq.s32.totalorder %s24, 0
    %p108 = por %p106, %p107
    %p109 = scmp.ne.s32.totalorder %s97, %s98
    %p110 = scmp.eq.s32.totalorder %s25, 1
    %p111 = por %p109, %p110
    %p113 = scmp.ne.s32.totalorder %s98, %s112
    %p114 = scmp.eq.s32.totalorder %s25, 0
    %p115 = por %p113, %p114
    %s117 = sadd.s32 %s116, 1
    %p120 = scmp.eq.s32.totalorder %s19, 1
    %p121 = scmp.ne.s32.totalorder %s116, %s118
    %p122 = scmp.eq.s32.totalorder %s19, 0
    %p123 = por %p121, %p122
    %p124 = scmp.ne.s32.totalorder %s116, %s118
    %p125 = scmp.eq.s32.totalorder %s24, 1
    %p126 = por %p124, %p125
    %p127 = scmp.ne.s32.totalorder %s118, %s119
    %p128 = scmp.eq.s32.totalorder %s24, 0
    %p129 = por %p127, %p128
    %p130 = scmp.ne.s32.totalorder %s118, %s119
    %p131 = scmp.eq.s32.totalorder %s25, 1
    %p132 = por %p130, %p131
    %p134 = scmp.ne.s32.totalorder %s119, %s133
    %p135 = scmp.eq.s32.totalorder %s25, 0
    %p136 = por %p134, %p135
    %s138 = sadd.s32 %s137, 1
    %p141 = scmp.eq.s32.totalorder %s19, 1
    %p142 = scmp.ne.s32.totalorder %s137, %s139
    %p143 = scmp.eq.s32.totalorder %s19, 0
    %p144 = por %p142, %p143
    %p145 = scmp.ne.s32.totalorder %s137, %s139
    %p146 = scmp.eq.s32.totalorder %s24, 1
    %p147 = por %p145, %p146
    %p148 = scmp.ne.s32.totalorder %s139, %s140
    %p149 = scmp.eq.s32.totalorder %s24, 0
    %p150 = por %p148, %p149
    %p151 = scmp.ne.s32.totalorder %s139, %s140
    %p152 = scmp.eq.s32.totalorder %s25, 1
    %p153 = por %p151, %p152
    %p155 = scmp.ne.s32.totalorder %s140, %s154
    %p156 = scmp.eq.s32.totalorder %s25, 0
    %p157 = por %p155, %p156
    %s159 = sadd.s32 %s158, 1
    %p162 = scmp.eq.s32.totalorder %s19, 1
    %p163 = scmp.ne.s32.totalorder %s158, %s160
    %p164 = scmp.eq.s32.totalorder %s19, 0
    %p165 = por %p163, %p164
    %p166 = scmp.ne.s32.totalorder %s158, %s160
    %p167 = scmp.eq.s32.totalorder %s24, 1
    %p168 = por %p166, %p167
    %p169 = scmp.ne.s32.totalorder %s160, %s161
    %p170 = scmp.eq.s32.totalorder %s24, 0
    %p171 = por %p169, %p170
    %p172 = scmp.ne.s32.totalorder %s160, %s161
    %p173 = scmp.eq.s32.totalorder %s25, 1
    %p174 = por %p172, %p173
    %p176 = scmp.ne.s32.totalorder %s161, %s175
    %p177 = scmp.eq.s32.totalorder %s25, 0
    %p178 = por %p176, %p177
    %s180 = sadd.s32 %s179, 1
    %p183 = scmp.eq.s32.totalorder %s19, 1
    %p184 = scmp.ne.s32.totalorder %s179, %s181
    %p185 = scmp.eq.s32.totalorder %s19, 0
    %p186 = por %p184, %p185
    %p187 = scmp.ne.s32.totalorder %s179, %s181
    %p188 = scmp.eq.s32.totalorder %s24, 1
    %p189 = por %p187, %p188
    %p190 = scmp.ne.s32.totalorder %s181, %s182
    %p191 = scmp.eq.s32.totalorder %s24, 0
    %p192 = por %p190, %p191
    %p193 = scmp.ne.s32.totalorder %s181, %s182
    %p194 = scmp.eq.s32.totalorder %s25, 1
    %p195 = por %p193, %p194
    %p197 = scmp.ne.s32.totalorder %s182, %s196
    %p198 = scmp.eq.s32.totalorder %s25, 0
    %p199 = por %p197, %p198
    %s201 = sadd.s32 %s200, 1
    %p204 = scmp.eq.s32.totalorder %s19, 1
    %p205 = scmp.ne.s32.totalorder %s200, %s202
    %p206 = scmp.eq.s32.totalorder %s19, 0
    %p207 = por %p205, %p206
    %p208 = scmp.ne.s32.totalorder %s200, %s202
    %p209 = scmp.eq.s32.totalorder %s24, 1
    %p210 = por %p208, %p209
    %p211 = scmp.ne.s32.totalorder %s202, %s203
    %p212 = scmp.eq.s32.totalorder %s24, 0
    %p213 = por %p211, %p212
    %p214 = scmp.ne.s32.totalorder %s202, %s203
    %p215 = scmp.eq.s32.totalorder %s25, 1
    %p216 = por %p214, %p215
    %p218 = scmp.ne.s32.totalorder %s203, %s217
    %p219 = scmp.eq.s32.totalorder %s25, 0
    %p220 = por %p218, %p219
    %s222 = sadd.s32 %s221, 1
    %p225 = scmp.eq.s32.totalorder %s19, 1
    %p226 = scmp.ne.s32.totalorder %s221, %s223
    %p227 = scmp.eq.s32.totalorder %s19, 0
    %p228 = por %p226, %p227
    %p229 = scmp.ne.s32.totalorder %s221, %s223
    %p230 = scmp.eq.s32.totalorder %s24, 1
    %p231 = por %p229, %p230
    %p232 = scmp.ne.s32.totalorder %s223, %s224
    %p233 = scmp.eq.s32.totalorder %s24, 0
    %p234 = por %p232, %p233
    %p235 = scmp.ne.s32.totalorder %s223, %s224
    %p236 = scmp.eq.s32.totalorder %s25, 1
    %p237 = por %p235, %p236
    %p239 = scmp.ne.s32.totalorder %s224, %s238
    %p240 = scmp.eq.s32.totalorder %s25, 0
    %p241 = por %p239, %p240
    %s243 = sadd.s32 %s242, 1
    %p246 = scmp.eq.s32.totalorder %s19, 1
    %p247 = scmp.ne.s32.totalorder %s242, %s244
    %p248 = scmp.eq.s32.totalorder %s19, 0
    %p249 = por %p247, %p248
    %p250 = scmp.ne.s32.totalorder %s242, %s244
    %p251 = scmp.eq.s32.totalorder %s24, 1
    %p252 = por %p250, %p251
    %p253 = scmp.ne.s32.totalorder %s244, %s245
    %p254 = scmp.eq.s32.totalorder %s24, 0
    %p255 = por %p253, %p254
    %p256 = scmp.ne.s32.totalorder %s244, %s245
    %p257 = scmp.eq.s32.totalorder %s25, 1
    %p258 = por %p256, %p257
    %p260 = scmp.ne.s32.totalorder %s245, %s259
    %p261 = scmp.eq.s32.totalorder %s25, 0
    %p262 = por %p260, %p261
    %s264 = sadd.s32 %s263, 1
    %p267 = scmp.eq.s32.totalorder %s19, 1
    %p268 = scmp.ne.s32.totalorder %s263, %s265
    %p269 = scmp.eq.s32.totalorder %s19, 0
    %p270 = por %p268, %p269
    %p271 = scmp.ne.s32.totalorder %s263, %s265
    %p272 = scmp.eq.s32.totalorder %s24, 1
    %p273 = por %p271, %p272
    %p274 = scmp.ne.s32.totalorder %s265, %s266
    %p275 = scmp.eq.s32.totalorder %s24, 0
    %p276 = por %p274, %p275
    %p277 = scmp.ne.s32.totalorder %s265, %s266
    %p278 = scmp.eq.s32.totalorder %s25, 1
    %p279 = por %p277, %p278
    %p281 = scmp.ne.s32.totalorder %s266, %s280
    %p282 = scmp.eq.s32.totalorder %s25, 0
    %p283 = por %p281, %p282
    %s285 = sadd.s32 %s284, 1
    %p288 = scmp.eq.s32.totalorder %s19, 1
    %p289 = scmp.ne.s32.totalorder %s284, %s286
    %p290 = scmp.eq.s32.totalorder %s19, 0
    %p291 = por %p289, %p290
    %p292 = scmp.ne.s32.totalorder %s284, %s286
    %p293 = scmp.eq.s32.totalorder %s24, 1
    %p294 = por %p292, %p293
    %p295 = scmp.ne.s32.totalorder %s286, %s287
    %p296 = scmp.eq.s32.totalorder %s24, 0
    %p297 = por %p295, %p296
    %p298 = scmp.ne.s32.totalorder %s286, %s287
    %p299 = scmp.eq.s32.totalorder %s25, 1
    %p300 = por %p298, %p299
    %p302 = scmp.ne.s32.totalorder %s287, %s301
    %p303 = scmp.eq.s32.totalorder %s25, 0
    %p304 = por %p302, %p303
    %s305 = ssub.s32 %s19, %s26
    %p306 = scmp.eq.s32.totalorder %s305, 0
    %s308 = sadd.s32 %s307, 1
    %s309 = scalar_select %p306, %s307, %s308
    %p312 = pneg %p306
    %p313 = scmp.eq.s32.totalorder %s19, 1
    %p314 = por %p312, %p313
    %p315 = scmp.ne.s32.totalorder %s307, %s310
    %p316 = scmp.eq.s32.totalorder %s19, 0
    %p317 = por %p315, %p316
    %p318 = scmp.ne.s32.totalorder %s307, %s310
    %p319 = scmp.eq.s32.totalorder %s24, 1
    %p320 = por %p318, %p319
    %p321 = scmp.ne.s32.totalorder %s310, %s311
    %p322 = scmp.eq.s32.totalorder %s24, 0
    %p323 = por %p321, %p322
    %p324 = scmp.ne.s32.totalorder %s310, %s311
    %p325 = scmp.eq.s32.totalorder %s25, 1
    %p326 = por %p324, %p325
    %p328 = scmp.ne.s32.totalorder %s311, %s327
    %p329 = scmp.eq.s32.totalorder %s25, 0
    %p330 = por %p328, %p329
    %p331 = scmp.le.s32.totalorder 1, %s19
    %p332 = scmp.lt.s32.totalorder %s19, 3
    %p333 = pnand %p331, %p332
    %p334 = pneg %p333
    // Predicated region
    $region9: #{residual_attention_block.1} parent=5 // pred_check
      _
    $region10: #{residual_attention_block.1} parent=5 // pred_check_branch
      %336 = sbr.rel (%p333) target = $region12
    $region11: #{residual_attention_block.1} parent=5 // pred_region
      %s337 = ssub.s32 %s19, 1
      // Predicated region
      $region13: #{residual_attention_block.1} parent=11 // pred_check
        %p338 = pneg %p66
      $region14: #{residual_attention_block.1} parent=11 // pred_check_branch
        %340 = sbr.rel (%p338) target = $region16
      $region15: #{residual_attention_block.1} parent=11 // pred_region
        _
      $region16: #{residual_attention_block.1} parent=11 // pred_fallthru
        _
      // Predicated region
      $region17: #{residual_attention_block.1} parent=11 // pred_check
        %p341 = pneg %p87
      $region18: #{residual_attention_block.1} parent=11 // pred_check_branch
        %343 = sbr.rel (%p341) target = $region20
      $region19: #{residual_attention_block.1} parent=11 // pred_region
        _
      $region20: #{residual_attention_block.1} parent=11 // pred_fallthru
        _
      // Predicated region
      $region21: #{residual_attention_block.1} parent=11 // pred_check
        %p344 = pneg %p108
      $region22: #{residual_attention_block.1} parent=11 // pred_check_branch
        %346 = sbr.rel (%p344) target = $region24
      $region23: #{residual_attention_block.1} parent=11 // pred_region
        _
      $region24: #{residual_attention_block.1} parent=11 // pred_fallthru
        _
      // Predicated region
      $region25: #{residual_attention_block.1} parent=11 // pred_check
        %p347 = pneg %p129
      $region26: #{residual_attention_block.1} parent=11 // pred_check_branch
        %349 = sbr.rel (%p347) target = $region28
      $region27: #{residual_attention_block.1} parent=11 // pred_region
        _
      $region28: #{residual_attention_block.1} parent=11 // pred_fallthru
        _
      // Predicated region
      $region29: #{residual_attention_block.1} parent=11 // pred_check
        %p350 = pneg %p150
      $region30: #{residual_attention_block.1} parent=11 // pred_check_branch
        %352 = sbr.rel (%p350) target = $region32
      $region31: #{residual_attention_block.1} parent=11 // pred_region
        _
      $region32: #{residual_attention_block.1} parent=11 // pred_fallthru
        _
      // Predicated region
      $region33: #{residual_attention_block.1} parent=11 // pred_check
        %p353 = pneg %p171
      $region34: #{residual_attention_block.1} parent=11 // pred_check_branch
        %355 = sbr.rel (%p353) target = $region36
      $region35: #{residual_attention_block.1} parent=11 // pred_region
        _
      $region36: #{residual_attention_block.1} parent=11 // pred_fallthru
        _
      // Predicated region
      $region37: #{residual_attention_block.1} parent=11 // pred_check
        %p356 = pneg %p192
      $region38: #{residual_attention_block.1} parent=11 // pred_check_branch
        %358 = sbr.rel (%p356) target = $region40
      $region39: #{residual_attention_block.1} parent=11 // pred_region
        _
      $region40: #{residual_attention_block.1} parent=11 // pred_fallthru
        _
      // Predicated region
      $region41: #{residual_attention_block.1} parent=11 // pred_check
        %p359 = pneg %p213
      $region42: #{residual_attention_block.1} parent=11 // pred_check_branch
        %361 = sbr.rel (%p359) target = $region44
      $region43: #{residual_attention_block.1} parent=11 // pred_region
        _
      $region44: #{residual_attention_block.1} parent=11 // pred_fallthru
        _
      // Predicated region
      $region45: #{residual_attention_block.1} parent=11 // pred_check
        %p362 = pneg %p234
      $region46: #{residual_attention_block.1} parent=11 // pred_check_branch
        %364 = sbr.rel (%p362) target = $region48
      $region47: #{residual_attention_block.1} parent=11 // pred_region
        _
      $region48: #{residual_attention_block.1} parent=11 // pred_fallthru
        _
      // Predicated region
      $region49: #{residual_attention_block.1} parent=11 // pred_check
        %p365 = pneg %p255
      $region50: #{residual_attention_block.1} parent=11 // pred_check_branch
        %367 = sbr.rel (%p365) target = $region52
      $region51: #{residual_attention_block.1} parent=11 // pred_region
        _
      $region52: #{residual_attention_block.1} parent=11 // pred_fallthru
        _
      // Predicated region
      $region53: #{residual_attention_block.1} parent=11 // pred_check
        %p368 = pneg %p276
      $region54: #{residual_attention_block.1} parent=11 // pred_check_branch
        %370 = sbr.rel (%p368) target = $region56
      $region55: #{residual_attention_block.1} parent=11 // pred_region
        _
      $region56: #{residual_attention_block.1} parent=11 // pred_fallthru
        _
      // Predicated region
      $region57: #{residual_attention_block.1} parent=11 // pred_check
        %p371 = pneg %p297
      $region58: #{residual_attention_block.1} parent=11 // pred_check_branch
        %373 = sbr.rel (%p371) target = $region60
      $region59: #{residual_attention_block.1} parent=11 // pred_region
        _
      $region60: #{residual_attention_block.1} parent=11 // pred_fallthru
        _
    $region12: #{residual_attention_block.1} parent=5 // pred_fallthru
      _
    %p374 = scmp.lt.s32.totalorder %s19, 2
    // Predicated region
    $region61: #{residual_attention_block.1} parent=5 // pred_check
      %p375 = pneg %p374
    $region62: #{residual_attention_block.1} parent=5 // pred_check_branch
      %377 = sbr.rel (%p375) target = $region64
    $region63: #{residual_attention_block.1} parent=5 // pred_region
      // Predicated region
      $region65: #{residual_attention_block.1} parent=63 // pred_check
        %p378 = pneg %p39
      $region66: #{residual_attention_block.1} parent=63 // pred_check_branch
        %380 = sbr.rel (%p378) target = $region68
      $region67: #{residual_attention_block.1} parent=63 // pred_region
        %p381 = scmp.lt.s32.totalorder %s19, 1
        %s382 = scalar_select %p381, %s19, 1
        %s383 = smul.addr %s382, 8
        %s384 = scalar_lea.vmem %s0, %s383
      $region68: #{residual_attention_block.1} parent=63 // pred_fallthru
        _
    $region64: #{residual_attention_block.1} parent=5 // pred_fallthru
      _
    %p385 = scmp.le.s32.totalorder 1, %s19
    %p386 = scmp.lt.s32.totalorder %s19, 3
    %p387 = pnand %p385, %p386
    %p388 = pneg %p387
    // Predicated region
    $region69: #{residual_attention_block.1} parent=5 // pred_check
      _
    $region70: #{residual_attention_block.1} parent=5 // pred_check_branch
      %390 = sbr.rel (%p387) target = $region72
    $region71: #{residual_attention_block.1} parent=5 // pred_region
      %s391 = ssub.s32 %s19, 1
      %p392 = scmp.lt.s32.totalorder %s24, 1
      %s393 = scalar_select %p392, %s24, 1
      %s394 = smul.addr %s393, 8
      %s395 = scalar_lea.vmem %s0, %s394
      %p396 = pneg %p45
      %p397 = pneg %p42
      %p398 = pneg %p66
      %p399 = pneg %p63
      %p400 = pneg %p87
      %p401 = pneg %p84
      %p402 = pneg %p108
      %p403 = pneg %p105
      %p404 = pneg %p129
      %p405 = pneg %p126
      %p406 = pneg %p150
      %p407 = pneg %p147
      %p408 = pneg %p171
      %p409 = pneg %p168
      %p410 = pneg %p192
      %p411 = pneg %p189
      %p412 = pneg %p213
      %p413 = pneg %p210
      %p414 = pneg %p234
      %p415 = pneg %p231
      %p416 = pneg %p255
      %p417 = pneg %p252
      %p418 = pneg %p276
      %p419 = pneg %p273
      %p420 = pneg %p297
      %p421 = pneg %p294
      %p422 = pneg %p323
      %p423 = pneg %p320
      %p424 = scmp.lt.s32.totalorder %s24, 1
      %s425 = scalar_select %p424, %s24, 1
      %s426 = smul.addr %s425, 8
      %s427 = scalar_lea.vmem %s13, %s426
      %p428 = scmp.lt.s32.totalorder %s24, 1
      %s429 = scalar_select %p428, %s24, 1
      %s430 = smul.addr %s429, 8
      %s431 = scalar_lea.vmem %s0, %s430
      %p432 = scmp.lt.s32.totalorder %s24, 1
      %s433 = scalar_select %p432, %s24, 1
      %s434 = smul.addr %s433, 8
      %s435 = scalar_lea.vmem %s13, %s434
      %v437 = vld [vmem:[%s431] sm:$0xff]
      %v438 = vld [vmem:[%s1] sm:$0x1]
      %v439 = vld [vmem:[%s2] sm:$0x1]
      %vm440 = vcmask 261120
      %v441 = vsel %vm440, %v437, 0.0
      %442 = vadd.xlane.f32.xlu0 %v441
      %v443 = vpop.xlane.xlu0 %442
      %v444 = vrcp.pop 32.0
      %v445 = vmul.f32 %v443, %v444
      %v446 = vsub.f32 %v437, %v445
      %v447 = vmul.f32 %v446, %v446
      %v448 = vsel %vm440, %v447, 0.0
      %449 = vadd.xlane.f32.xlu0 %v448
      %v450 = vpop.xlane.xlu0 %449
      %v451 = vmul.f32 %v450, %v444
      %v452 = vadd.f32 %v451, 1e-05
      %v453 = vrsqrt.pop %v452
      %v454 = vmul.f32 %v446, %v453
      %v456 = vlaneseq
      %v457 = vshrl.u32 %v456, 7
      %v458 = vsub.s32 0, %v457
      %v459 = vrot.slane %v438, %v458
      %v461 = vmul.f32 %v454, %v459
      %v463 = vlaneseq
      %v464 = vshrl.u32 %v463, 7
      %v465 = vsub.s32 0, %v464
      %v466 = vrot.slane %v439, %v465
      %v468 = vadd.f32 %v461, %v466
      %v469 = vpack.c.bf16 %v468, %v468
      %v470 = vld [vmem:[%s3] sm:$0xf]
      %v471 = vld [vmem:[%s3 + $0x4] sm:$0xf]
      %v472 = vld [vmem:[%s3 + $0x8] sm:$0xf]
      %v473 = vld [vmem:[%s3 + $0xc] sm:$0xf]
      %v474 = vld [vmem:[%s4] sm:$0x1]
      %v476 = vlaneseq
      %v477 = vshrl.u32 %v476, 7
      %v478 = vsub.s32 0, %v477
      %v479 = vrot.slane %v474, %v478
      %v485 = vunpack.c.l.b16 %v470
      %v486 = vunpack.c.l.b16 %v471
      %v487 = vunpack.c.l.b16 %v472
      %v488 = vunpack.c.l.b16 %v473
      %v489 = vpack.c.b16 %v486, %v485
      %v490 = vpack.c.b16 %v488, %v487
      %v494 = vsel %vm440, %v469, 0
      %496 = vmatprep.subr.bf16.mxu0 0
      %497 = vmatpush1.bf16.msra.mxu0 0
      %498 = vmatprep.subr.bf16.mxu0 0
      %499 = vmatpush1.bf16.msra.mxu0 0
      %500 = vmatprep.subr.bf16.mxu0 0
      %501 = vmatpush1.bf16.msra.mxu0 0
      %502 = vmatprep.subr.bf16.mxu0 0
      %503 = vmatpush1.bf16.msra.mxu0 0
      %504 = vmatprep.subr.bf16.mxu0 0
      %505 = vmatpush1.bf16.msra.mxu0 0
      %506 = vmatprep.subr.bf16.mxu0 0
      %507 = vmatpush1.bf16.msra.mxu0 0
      %508 = vmatprep.subr.bf16.mxu0 0
      %509 = vmatpush1.bf16.msra.mxu0 %v490
      %510 = vmatprep.subr.bf16.mxu0 0
      %511 = vmatpush1.bf16.msra.mxu0 %v489
      %512 = vmatprep.subr.bf16.mxu0 0
      %513 = vmatpush2.bf16.msra.mxu0 0
      %514 = vmatprep.subr.bf16.mxu0 0
      %515 = vmatpush2.bf16.msra.mxu0 0
      %516 = vmatprep.subr.bf16.mxu0 0
      %517 = vmatpush2.bf16.msra.mxu0 0
      %518 = vmatprep.subr.bf16.mxu0 0
      %519 = vmatpush2.bf16.msra.mxu0 0
      %520 = vmatprep.subr.bf16.mxu0 0
      %521 = vmatpush2.bf16.msra.mxu0 0
      %522 = vmatprep.subr.bf16.mxu0 0
      %523 = vmatpush2.bf16.msra.mxu0 0
      %524 = vmatprep.subr.bf16.mxu0 0
      %525 = vmatpush2.bf16.msra.mxu0 0
      %526 = vmatprep.subr.bf16.mxu0 0
      %527 = vmatpush2.bf16.msra.mxu0 0
      %528 = vmatprep.mubr.bf16.mxu0 0
      %529 = vmatmul.mubr.bf16.gmra.mxu0 %v494
      %v530 = vpop.f32.mrf.mxu0
      %v531 = vadd.f32 %v479, %v530
      %v532 = vpop.f32.mrf.mxu0
      %v533 = vpop.f32.mrf.mxu0
      %v534 = vpop.f32.mrf.mxu0
      %535 = vdwg.mxu0
      %v536 = vmul.f32 %v531, 0.35355338
      %v537 = vpack.c.bf16 %v536, %v536
      %v538 = vpack.c.bf16 %v531, %v531
      %v539 = vld [vmem:[%s5] sm:$0xf]
      %v540 = vld [vmem:[%s5 + $0x4] sm:$0xf]
      %v541 = vld [vmem:[%s5 + $0x8] sm:$0xf]
      %v542 = vld [vmem:[%s5 + $0xc] sm:$0xf]
      %544 = vrot.lane.b32.xlu0 %v538, 96
      %v545 = vpop.permute.xlu0 %544
      %vm546 = vcmask 64512
      %v548 = vsel %vm546, %v537, 0
      %v551 = vsel %vm546, %v545, 0
      %553 = vmatprep.subr.bf16.mxu0 0
      %554 = vmatpush1.bf16.xpose.msra.mxu0 0
      %555 = vmatprep.subr.bf16.mxu0 0
      %556 = vmatpush1.bf16.xpose.msra.mxu0 0
      %557 = vmatprep.subr.bf16.mxu0 0
      %558 = vmatpush1.bf16.xpose.msra.mxu0 0
      %559 = vmatprep.subr.bf16.mxu0 0
      %560 = vmatpush1.bf16.xpose.msra.mxu0 0
      %561 = vmatprep.subr.bf16.mxu0 0
      %562 = vmatpush1.bf16.xpose.msra.mxu0 0
      %563 = vmatprep.subr.bf16.mxu0 0
      %564 = vmatpush1.bf16.xpose.msra.mxu0 0
      %565 = vmatprep.subr.bf16.mxu0 0
      %566 = vmatpush1.bf16.xpose.msra.mxu0 0
      %567 = vmatprep.subr.bf16.mxu0 0
      %568 = vmatpush1.bf16.xpose.msra.mxu0 %v551
      %569 = vmatprep.subr.bf16.mxu0 0
      %570 = vmatpush2.bf16.xpose.msra.mxu0 0
      %571 = vmatprep.subr.bf16.mxu0 0
      %572 = vmatpush2.bf16.xpose.msra.mxu0 0
      %573 = vmatprep.subr.bf16.mxu0 0
      %574 = vmatpush2.bf16.xpose.msra.mxu0 0
      %575 = vmatprep.subr.bf16.mxu0 0
      %576 = vmatpush2.bf16.xpose.msra.mxu0 0
      %577 = vmatprep.subr.bf16.mxu0 0
      %578 = vmatpush2.bf16.xpose.msra.mxu0 0
      %579 = vmatprep.subr.bf16.mxu0 0
      %580 = vmatpush2.bf16.xpose.msra.mxu0 0
      %581 = vmatprep.subr.bf16.mxu0 0
      %582 = vmatpush2.bf16.xpose.msra.mxu0 0
      %583 = vmatprep.subr.bf16.mxu0 0
      %584 = vmatpush2.bf16.xpose.msra.mxu0 0
      %585 = vmatprep.mubr.bf16.mxu0 0
      %586 = vmatmul.mubr.bf16.gmra.mxu0 %v548
      %v587 = vpop.f32.mrf.mxu0
      %v588 = vadd.f32 0.0, %v587
      %v589 = vpop.f32.mrf.mxu0
      %v590 = vpop.f32.mrf.mxu0
      %v591 = vpop.f32.mrf.mxu0
      %592 = vdwg.mxu0
      %v593 = vsel %vm546, %v588, -inf
      %594 = vmax.xlane.f32.xlu0 %v593
      %v595 = vpop.xlane.xlu0 %594
      %v596 = vsub.f32 %v588, %v595
      %v597 = vmul.f32 %v596, 1.442695
      %v598 = vpow.pop %v597
      %v599 = vsel %vm546, %v598, 0.0
      %600 = vadd.xlane.f32.xlu0 %v599
      %v601 = vpop.xlane.xlu0 %600
      %v602 = vrcp.pop %v601
      %v603 = vpack.c.bf16 %v598, %v598
      %604 = vrot.lane.b32.xlu0 %v538, 64
      %v605 = vpop.permute.xlu0 %604
      %v607 = vsel %vm546, %v603, 0
      %vm609 = vcmask 1043456
      %v611 = vsel %vm609, %v605, 0
      %613 = vmatprep.subr.bf16.mxu0 0
      %614 = vmatpush1.bf16.msra.mxu0 0
      %615 = vmatprep.subr.bf16.mxu0 0
      %616 = vmatpush1.bf16.msra.mxu0 0
      %617 = vmatprep.subr.bf16.mxu0 0
      %618 = vmatpush1.bf16.msra.mxu0 0
      %619 = vmatprep.subr.bf16.mxu0 0
      %620 = vmatpush1.bf16.msra.mxu0 0
      %621 = vmatprep.subr.bf16.mxu0 0
      %622 = vmatpush1.bf16.msra.mxu0 0
      %623 = vmatprep.subr.bf16.mxu0 0
      %624 = vmatpush1.bf16.msra.mxu0 0
      %625 = vmatprep.subr.bf16.mxu0 0
      %626 = vmatpush1.bf16.msra.mxu0 0
      %627 = vmatprep.subr.bf16.mxu0 0
      %628 = vmatpush1.bf16.msra.mxu0 %v611
      %629 = vmatprep.subr.bf16.mxu0 0
      %630 = vmatpush2.bf16.msra.mxu0 0
      %631 = vmatprep.subr.bf16.mxu0 0
      %632 = vmatpush2.bf16.msra.mxu0 0
      %633 = vmatprep.subr.bf16.mxu0 0
      %634 = vmatpush2.bf16.msra.mxu0 0
      %635 = vmatprep.subr.bf16.mxu0 0
      %636 = vmatpush2.bf16.msra.mxu0 0
      %637 = vmatprep.subr.bf16.mxu0 0
      %638 = vmatpush2.bf16.msra.mxu0 0
      %639 = vmatprep.subr.bf16.mxu0 0
      %640 = vmatpush2.bf16.msra.mxu0 0
      %641 = vmatprep.subr.bf16.mxu0 0
      %642 = vmatpush2.bf16.msra.mxu0 0
      %643 = vmatprep.subr.bf16.mxu0 0
      %644 = vmatpush2.bf16.msra.mxu0 0
      %645 = vmatprep.mubr.bf16.mxu0 0
      %646 = vmatmul.mubr.bf16.gmra.mxu0 %v607
      %v647 = vpop.f32.mrf.mxu0
      %v648 = vadd.f32 0.0, %v647
      %v649 = vpop.f32.mrf.mxu0
      %v650 = vpop.f32.mrf.mxu0
      %v651 = vpop.f32.mrf.mxu0
      %652 = vdwg.mxu0
      %v653 = vmul.f32 %v648, %v602
      %v654 = vpack.c.bf16 %v653, %v653
      %656 = vrot.lane.b32.xlu0 %v537, 120
      %v657 = vpop.permute.xlu0 %656
      %658 = vrot.lane.b32.xlu0 %v538, 88
      %v659 = vpop.permute.xlu0 %658
      %v661 = vsel %vm546, %v657, 0
      %v664 = vsel %vm546, %v659, 0
      %666 = vmatprep.subr.bf16.mxu0 0
      %667 = vmatpush1.bf16.xpose.msra.mxu0 0
      %668 = vmatprep.subr.bf16.mxu0 0
      %669 = vmatpush1.bf16.xpose.msra.mxu0 0
      %670 = vmatprep.subr.bf16.mxu0 0
      %671 = vmatpush1.bf16.xpose.msra.mxu0 0
      %672 = vmatprep.subr.bf16.mxu0 0
      %673 = vmatpush1.bf16.xpose.msra.mxu0 0
      %674 = vmatprep.subr.bf16.mxu0 0
      %675 = vmatpush1.bf16.xpose.msra.mxu0 0
      %676 = vmatprep.subr.bf16.mxu0 0
      %677 = vmatpush1.bf16.xpose.msra.mxu0 0
      %678 = vmatprep.subr.bf16.mxu0 0
      %679 = vmatpush1.bf16.xpose.msra.mxu0 0
      %680 = vmatprep.subr.bf16.mxu0 0
      %681 = vmatpush1.bf16.xpose.msra.mxu0 %v664
      %682 = vmatprep.subr.bf16.mxu0 0
      %683 = vmatpush2.bf16.xpose.msra.mxu0 0
      %684 = vmatprep.subr.bf16.mxu0 0
      %685 = vmatpush2.bf16.xpose.msra.mxu0 0
      %686 = vmatprep.subr.bf16.mxu0 0
      %687 = vmatpush2.bf16.xpose.msra.mxu0 0
      %688 = vmatprep.subr.bf16.mxu0 0
      %689 = vmatpush2.bf16.xpose.msra.mxu0 0
      %690 = vmatprep.subr.bf16.mxu0 0
      %691 = vmatpush2.bf16.xpose.msra.mxu0 0
      %692 = vmatprep.subr.bf16.mxu0 0
      %693 = vmatpush2.bf16.xpose.msra.mxu0 0
      %694 = vmatprep.subr.bf16.mxu0 0
      %695 = vmatpush2.bf16.xpose.msra.mxu0 0
      %696 = vmatprep.subr.bf16.mxu0 0
      %697 = vmatpush2.bf16.xpose.msra.mxu0 0
      %698 = vmatprep.mubr.bf16.mxu0 0
      %699 = vmatmul.mubr.bf16.gmra.mxu0 %v661
      %v700 = vpop.f32.mrf.mxu0
      %v701 = vadd.f32 0.0, %v700
      %v702 = vpop.f32.mrf.mxu0
      %v703 = vpop.f32.mrf.mxu0
      %v704 = vpop.f32.mrf.mxu0
      %705 = vdwg.mxu0
      %v706 = vsel %vm546, %v701, -inf
      %707 = vmax.xlane.f32.xlu0 %v706
      %v708 = vpop.xlane.xlu0 %707
      %v709 = vsub.f32 %v701, %v708
      %v710 = vmul.f32 %v709, 1.442695
      %v711 = vpow.pop %v710
      %v712 = vsel %vm546, %v711, 0.0
      %713 = vadd.xlane.f32.xlu0 %v712
      %v714 = vpop.xlane.xlu0 %713
      %v715 = vrcp.pop %v714
      %v716 = vpack.c.bf16 %v711, %v711
      %717 = vrot.lane.b32.xlu0 %v538, 56
      %v718 = vpop.permute.xlu0 %717
      %v720 = vsel %vm546, %v716, 0
      %v723 = vsel %vm609, %v718, 0
      %725 = vmatprep.subr.bf16.mxu0 0
      %726 = vmatpush1.bf16.msra.mxu0 0
      %727 = vmatprep.subr.bf16.mxu0 0
      %728 = vmatpush1.bf16.msra.mxu0 0
      %729 = vmatprep.subr.bf16.mxu0 0
      %730 = vmatpush1.bf16.msra.mxu0 0
      %731 = vmatprep.subr.bf16.mxu0 0
      %732 = vmatpush1.bf16.msra.mxu0 0
      %733 = vmatprep.subr.bf16.mxu0 0
      %734 = vmatpush1.bf16.msra.mxu0 0
      %735 = vmatprep.subr.bf16.mxu0 0
      %736 = vmatpush1.bf16.msra.mxu0 0
      %737 = vmatprep.subr.bf16.mxu0 0
      %738 = vmatpush1.bf16.msra.mxu0 0
      %739 = vmatprep.subr.bf16.mxu0 0
      %740 = vmatpush1.bf16.msra.mxu0 %v723
      %741 = vmatprep.subr.bf16.mxu0 0
      %742 = vmatpush2.bf16.msra.mxu0 0
      %743 = vmatprep.subr.bf16.mxu0 0
      %744 = vmatpush2.bf16.msra.mxu0 0
      %745 = vmatprep.subr.bf16.mxu0 0
      %746 = vmatpush2.bf16.msra.mxu0 0
      %747 = vmatprep.subr.bf16.mxu0 0
      %748 = vmatpush2.bf16.msra.mxu0 0
      %749 = vmatprep.subr.bf16.mxu0 0
      %750 = vmatpush2.bf16.msra.mxu0 0
      %751 = vmatprep.subr.bf16.mxu0 0
      %752 = vmatpush2.bf16.msra.mxu0 0
      %753 = vmatprep.subr.bf16.mxu0 0
      %754 = vmatpush2.bf16.msra.mxu0 0
      %755 = vmatprep.subr.bf16.mxu0 0
      %756 = vmatpush2.bf16.msra.mxu0 0
      %757 = vmatprep.mubr.bf16.mxu0 0
      %758 = vmatmul.mubr.bf16.gmra.mxu0 %v720
      %v759 = vpop.f32.mrf.mxu0
      %v760 = vadd.f32 0.0, %v759
      %v761 = vpop.f32.mrf.mxu0
      %v762 = vpop.f32.mrf.mxu0
      %v763 = vpop.f32.mrf.mxu0
      %764 = vdwg.mxu0
      %v765 = vmul.f32 %v760, %v715
      %v766 = vpack.c.bf16 %v765, %v765
      %v768 = vsel %vm546, %v766, 0
      %v771 = vsel %vm609, %v540, 0
      %773 = vmatprep.subr.bf16.mxu0 0
      %774 = vmatpush1.bf16.msra.mxu0 0
      %775 = vmatprep.subr.bf16.mxu0 0
      %776 = vmatpush1.bf16.msra.mxu0 0
      %777 = vmatprep.subr.bf16.mxu0 0
      %778 = vmatpush1.bf16.msra.mxu0 0
      %779 = vmatprep.subr.bf16.mxu0 0
      %780 = vmatpush1.bf16.msra.mxu0 0
      %781 = vmatprep.subr.bf16.mxu0 0
      %782 = vmatpush1.bf16.msra.mxu0 0
      %783 = vmatprep.subr.bf16.mxu0 0
      %784 = vmatpush1.bf16.msra.mxu0 0
      %785 = vmatprep.subr.bf16.mxu0 0
      %786 = vmatpush1.bf16.msra.mxu0 0
      %787 = vmatprep.subr.bf16.mxu0 0
      %788 = vmatpush1.bf16.msra.mxu0 %v771
      %789 = vmatprep.subr.bf16.mxu0 0
      %790 = vmatpush2.bf16.msra.mxu0 0
      %791 = vmatprep.subr.bf16.mxu0 0
      %792 = vmatpush2.bf16.msra.mxu0 0
      %793 = vmatprep.subr.bf16.mxu0 0
      %794 = vmatpush2.bf16.msra.mxu0 0
      %795 = vmatprep.subr.bf16.mxu0 0
      %796 = vmatpush2.bf16.msra.mxu0 0
      %797 = vmatprep.subr.bf16.mxu0 0
      %798 = vmatpush2.bf16.msra.mxu0 0
      %799 = vmatprep.subr.bf16.mxu0 0
      %800 = vmatpush2.bf16.msra.mxu0 0
      %801 = vmatprep.subr.bf16.mxu0 0
      %802 = vmatpush2.bf16.msra.mxu0 0
      %803 = vmatprep.subr.bf16.mxu0 0
      %804 = vmatpush2.bf16.msra.mxu0 0
      %805 = vmatprep.mubr.bf16.mxu0 0
      %806 = vmatmul.mubr.bf16.gmra.mxu0 %v768
      %v807 = vpop.f32.mrf.mxu0
      %v808 = vadd.f32 0.0, %v807
      %v809 = vpop.f32.mrf.mxu0
      %v810 = vpop.f32.mrf.mxu0
      %v811 = vpop.f32.mrf.mxu0
      %812 = vdwg.mxu0
      %v814 = vsel %vm546, %v654, 0
      %v817 = vsel %vm609, %v539, 0
      %819 = vmatprep.subr.bf16.mxu0 0
      %820 = vmatpush1.bf16.msra.mxu0 0
      %821 = vmatprep.subr.bf16.mxu0 0
      %822 = vmatpush1.bf16.msra.mxu0 0
      %823 = vmatprep.subr.bf16.mxu0 0
      %824 = vmatpush1.bf16.msra.mxu0 0
      %825 = vmatprep.subr.bf16.mxu0 0
      %826 = vmatpush1.bf16.msra.mxu0 0
      %827 = vmatprep.subr.bf16.mxu0 0
      %828 = vmatpush1.bf16.msra.mxu0 0
      %829 = vmatprep.subr.bf16.mxu0 0
      %830 = vmatpush1.bf16.msra.mxu0 0
      %831 = vmatprep.subr.bf16.mxu0 0
      %832 = vmatpush1.bf16.msra.mxu0 0
      %833 = vmatprep.subr.bf16.mxu0 0
      %834 = vmatpush1.bf16.msra.mxu0 %v817
      %835 = vmatprep.subr.bf16.mxu0 0
      %836 = vmatpush2.bf16.msra.mxu0 0
      %837 = vmatprep.subr.bf16.mxu0 0
      %838 = vmatpush2.bf16.msra.mxu0 0
      %839 = vmatprep.subr.bf16.mxu0 0
      %840 = vmatpush2.bf16.msra.mxu0 0
      %841 = vmatprep.subr.bf16.mxu0 0
      %842 = vmatpush2.bf16.msra.mxu0 0
      %843 = vmatprep.subr.bf16.mxu0 0
      %844 = vmatpush2.bf16.msra.mxu0 0
      %845 = vmatprep.subr.bf16.mxu0 0
      %846 = vmatpush2.bf16.msra.mxu0 0
      %847 = vmatprep.subr.bf16.mxu0 0
      %848 = vmatpush2.bf16.msra.mxu0 0
      %849 = vmatprep.subr.bf16.mxu0 0
      %850 = vmatpush2.bf16.msra.mxu0 0
      %851 = vmatprep.mubr.bf16.mxu0 0
      %852 = vmatmul.mubr.bf16.gmra.mxu0 %v814
      %v853 = vpop.f32.mrf.mxu0
      %v854 = vadd.f32 %v808, %v853
      %v855 = vpop.f32.mrf.mxu0
      %v856 = vpop.f32.mrf.mxu0
      %v857 = vpop.f32.mrf.mxu0
      %858 = vdwg.mxu0
      %859 = vrot.lane.b32.xlu0 %v537, 112
      %v860 = vpop.permute.xlu0 %859
      %861 = vrot.lane.b32.xlu0 %v538, 80
      %v862 = vpop.permute.xlu0 %861
      %v864 = vsel %vm546, %v860, 0
      %v867 = vsel %vm546, %v862, 0
      %869 = vmatprep.subr.bf16.mxu0 0
      %870 = vmatpush1.bf16.xpose.msra.mxu0 0
      %871 = vmatprep.subr.bf16.mxu0 0
      %872 = vmatpush1.bf16.xpose.msra.mxu0 0
      %873 = vmatprep.subr.bf16.mxu0 0
      %874 = vmatpush1.bf16.xpose.msra.mxu0 0
      %875 = vmatprep.subr.bf16.mxu0 0
      %876 = vmatpush1.bf16.xpose.msra.mxu0 0
      %877 = vmatprep.subr.bf16.mxu0 0
      %878 = vmatpush1.bf16.xpose.msra.mxu0 0
      %879 = vmatprep.subr.bf16.mxu0 0
      %880 = vmatpush1.bf16.xpose.msra.mxu0 0
      %881 = vmatprep.subr.bf16.mxu0 0
      %882 = vmatpush1.bf16.xpose.msra.mxu0 0
      %883 = vmatprep.subr.bf16.mxu0 0
      %884 = vmatpush1.bf16.xpose.msra.mxu0 %v867
      %885 = vmatprep.subr.bf16.mxu0 0
      %886 = vmatpush2.bf16.xpose.msra.mxu0 0
      %887 = vmatprep.subr.bf16.mxu0 0
      %888 = vmatpush2.bf16.xpose.msra.mxu0 0
      %889 = vmatprep.subr.bf16.mxu0 0
      %890 = vmatpush2.bf16.xpose.msra.mxu0 0
      %891 = vmatprep.subr.bf16.mxu0 0
      %892 = vmatpush2.bf16.xpose.msra.mxu0 0
      %893 = vmatprep.subr.bf16.mxu0 0
      %894 = vmatpush2.bf16.xpose.msra.mxu0 0
      %895 = vmatprep.subr.bf16.mxu0 0
      %896 = vmatpush2.bf16.xpose.msra.mxu0 0
      %897 = vmatprep.subr.bf16.mxu0 0
      %898 = vmatpush2.bf16.xpose.msra.mxu0 0
      %899 = vmatprep.subr.bf16.mxu0 0
      %900 = vmatpush2.bf16.xpose.msra.mxu0 0
      %901 = vmatprep.mubr.bf16.mxu0 0
      %902 = vmatmul.mubr.bf16.gmra.mxu0 %v864
      %v903 = vpop.f32.mrf.mxu0
      %v904 = vadd.f32 0.0, %v903
      %v905 = vpop.f32.mrf.mxu0
      %v906 = vpop.f32.mrf.mxu0
      %v907 = vpop.f32.mrf.mxu0
      %908 = vdwg.mxu0
      %v909 = vsel %vm546, %v904, -inf
      %910 = vmax.xlane.f32.xlu0 %v909
      %v911 = vpop.xlane.xlu0 %910
      %v912 = vsub.f32 %v904, %v911
      %v913 = vmul.f32 %v912, 1.442695
      %v914 = vpow.pop %v913
      %v915 = vsel %vm546, %v914, 0.0
      %916 = vadd.xlane.f32.xlu0 %v915
      %v917 = vpop.xlane.xlu0 %916
      %v918 = vrcp.pop %v917
      %v919 = vpack.c.bf16 %v914, %v914
      %920 = vrot.lane.b32.xlu0 %v538, 48
      %v921 = vpop.permute.xlu0 %920
      %v923 = vsel %vm546, %v919, 0
      %v926 = vsel %vm609, %v921, 0
      %928 = vmatprep.subr.bf16.mxu0 0
      %929 = vmatpush1.bf16.msra.mxu0 0
      %930 = vmatprep.subr.bf16.mxu0 0
      %931 = vmatpush1.bf16.msra.mxu0 0
      %932 = vmatprep.subr.bf16.mxu0 0
      %933 = vmatpush1.bf16.msra.mxu0 0
      %934 = vmatprep.subr.bf16.mxu0 0
      %935 = vmatpush1.bf16.msra.mxu0 0
      %936 = vmatprep.subr.bf16.mxu0 0
      %937 = vmatpush1.bf16.msra.mxu0 0
      %938 = vmatprep.subr.bf16.mxu0 0
      %939 = vmatpush1.bf16.msra.mxu0 0
      %940 = vmatprep.subr.bf16.mxu0 0
      %941 = vmatpush1.bf16.msra.mxu0 0
      %942 = vmatprep.subr.bf16.mxu0 0
      %943 = vmatpush1.bf16.msra.mxu0 %v926
      %944 = vmatprep.subr.bf16.mxu0 0
      %945 = vmatpush2.bf16.msra.mxu0 0
      %946 = vmatprep.subr.bf16.mxu0 0
      %947 = vmatpush2.bf16.msra.mxu0 0
      %948 = vmatprep.subr.bf16.mxu0 0
      %949 = vmatpush2.bf16.msra.mxu0 0
      %950 = vmatprep.subr.bf16.mxu0 0
      %951 = vmatpush2.bf16.msra.mxu0 0
      %952 = vmatprep.subr.bf16.mxu0 0
      %953 = vmatpush2.bf16.msra.mxu0 0
      %954 = vmatprep.subr.bf16.mxu0 0
      %955 = vmatpush2.bf16.msra.mxu0 0
      %956 = vmatprep.subr.bf16.mxu0 0
      %957 = vmatpush2.bf16.msra.mxu0 0
      %958 = vmatprep.subr.bf16.mxu0 0
      %959 = vmatpush2.bf16.msra.mxu0 0
      %960 = vmatprep.mubr.bf16.mxu0 0
      %961 = vmatmul.mubr.bf16.gmra.mxu0 %v923
      %v962 = vpop.f32.mrf.mxu0
      %v963 = vadd.f32 0.0, %v962
      %v964 = vpop.f32.mrf.mxu0
      %v965 = vpop.f32.mrf.mxu0
      %v966 = vpop.f32.mrf.mxu0
      %967 = vdwg.mxu0
      %v968 = vmul.f32 %v963, %v918
      %v969 = vpack.c.bf16 %v968, %v968
      %v971 = vsel %vm546, %v969, 0
      %v974 = vsel %vm609, %v541, 0
      %976 = vmatprep.subr.bf16.mxu0 0
      %977 = vmatpush1.bf16.msra.mxu0 0
      %978 = vmatprep.subr.bf16.mxu0 0
      %979 = vmatpush1.bf16.msra.mxu0 0
      %980 = vmatprep.subr.bf16.mxu0 0
      %981 = vmatpush1.bf16.msra.mxu0 0
      %982 = vmatprep.subr.bf16.mxu0 0
      %983 = vmatpush1.bf16.msra.mxu0 0
      %984 = vmatprep.subr.bf16.mxu0 0
      %985 = vmatpush1.bf16.msra.mxu0 0
      %986 = vmatprep.subr.bf16.mxu0 0
      %987 = vmatpush1.bf16.msra.mxu0 0
      %988 = vmatprep.subr.bf16.mxu0 0
      %989 = vmatpush1.bf16.msra.mxu0 0
      %990 = vmatprep.subr.bf16.mxu0 0
      %991 = vmatpush1.bf16.msra.mxu0 %v974
      %992 = vmatprep.subr.bf16.mxu0 0
      %993 = vmatpush2.bf16.msra.mxu0 0
      %994 = vmatprep.subr.bf16.mxu0 0
      %995 = vmatpush2.bf16.msra.mxu0 0
      %996 = vmatprep.subr.bf16.mxu0 0
      %997 = vmatpush2.bf16.msra.mxu0 0
      %998 = vmatprep.subr.bf16.mxu0 0
      %999 = vmatpush2.bf16.msra.mxu0 0
      %1000 = vmatprep.subr.bf16.mxu0 0
      %1001 = vmatpush2.bf16.msra.mxu0 0
      %1002 = vmatprep.subr.bf16.mxu0 0
      %1003 = vmatpush2.bf16.msra.mxu0 0
      %1004 = vmatprep.subr.bf16.mxu0 0
      %1005 = vmatpush2.bf16.msra.mxu0 0
      %1006 = vmatprep.subr.bf16.mxu0 0
      %1007 = vmatpush2.bf16.msra.mxu0 0
      %1008 = vmatprep.mubr.bf16.mxu0 0
      %1009 = vmatmul.mubr.bf16.gmra.mxu0 %v971
      %v1010 = vpop.f32.mrf.mxu0
      %v1011 = vadd.f32 0.0, %v1010
      %v1012 = vpop.f32.mrf.mxu0
      %v1013 = vpop.f32.mrf.mxu0
      %v1014 = vpop.f32.mrf.mxu0
      %1015 = vdwg.mxu0
      %v1016 = vadd.f32 %v854, %v1011
      %1017 = vrot.lane.b32.xlu0 %v537, 104
      %v1018 = vpop.permute.xlu0 %1017
      %1019 = vrot.lane.b32.xlu0 %v538, 72
      %v1020 = vpop.permute.xlu0 %1019
      %v1022 = vsel %vm546, %v1018, 0
      %v1025 = vsel %vm546, %v1020, 0
      %1027 = vmatprep.subr.bf16.mxu0 0
      %1028 = vmatpush1.bf16.xpose.msra.mxu0 0
      %1029 = vmatprep.subr.bf16.mxu0 0
      %1030 = vmatpush1.bf16.xpose.msra.mxu0 0
      %1031 = vmatprep.subr.bf16.mxu0 0
      %1032 = vmatpush1.bf16.xpose.msra.mxu0 0
      %1033 = vmatprep.subr.bf16.mxu0 0
      %1034 = vmatpush1.bf16.xpose.msra.mxu0 0
      %1035 = vmatprep.subr.bf16.mxu0 0
      %1036 = vmatpush1.bf16.xpose.msra.mxu0 0
      %1037 = vmatprep.subr.bf16.mxu0 0
      %1038 = vmatpush1.bf16.xpose.msra.mxu0 0
      %1039 = vmatprep.subr.bf16.mxu0 0
      %1040 = vmatpush1.bf16.xpose.msra.mxu0 0
      %1041 = vmatprep.subr.bf16.mxu0 0
      %1042 = vmatpush1.bf16.xpose.msra.mxu0 %v1025
      %1043 = vmatprep.subr.bf16.mxu0 0
      %1044 = vmatpush2.bf16.xpose.msra.mxu0 0
      %1045 = vmatprep.subr.bf16.mxu0 0
      %1046 = vmatpush2.bf16.xpose.msra.mxu0 0
      %1047 = vmatprep.subr.bf16.mxu0 0
      %1048 = vmatpush2.bf16.xpose.msra.mxu0 0
      %1049 = vmatprep.subr.bf16.mxu0 0
      %1050 = vmatpush2.bf16.xpose.msra.mxu0 0
      %1051 = vmatprep.subr.bf16.mxu0 0
      %1052 = vmatpush2.bf16.xpose.msra.mxu0 0
      %1053 = vmatprep.subr.bf16.mxu0 0
      %1054 = vmatpush2.bf16.xpose.msra.mxu0 0
      %1055 = vmatprep.subr.bf16.mxu0 0
      %1056 = vmatpush2.bf16.xpose.msra.mxu0 0
      %1057 = vmatprep.subr.bf16.mxu0 0
      %1058 = vmatpush2.bf16.xpose.msra.mxu0 0
      %1059 = vmatprep.mubr.bf16.mxu0 0
      %1060 = vmatmul.mubr.bf16.gmra.mxu0 %v1022
      %v1061 = vpop.f32.mrf.mxu0
      %v1062 = vadd.f32 0.0, %v1061
      %v1063 = vpop.f32.mrf.mxu0
      %v1064 = vpop.f32.mrf.mxu0
      %v1065 = vpop.f32.mrf.mxu0
      %1066 = vdwg.mxu0
      %v1067 = vsel %vm546, %v1062, -inf
      %1068 = vmax.xlane.f32.xlu0 %v1067
      %v1069 = vpop.xlane.xlu0 %1068
      %v1070 = vsub.f32 %v1062, %v1069
      %v1071 = vmul.f32 %v1070, 1.442695
      %v1072 = vpow.pop %v1071
      %v1073 = vsel %vm546, %v1072, 0.0
      %1074 = vadd.xlane.f32.xlu0 %v1073
      %v1075 = vpop.xlane.xlu0 %1074
      %v1076 = vrcp.pop %v1075
      %v1077 = vpack.c.bf16 %v1072, %v1072
      %1078 = vrot.lane.b32.xlu0 %v538, 40
      %v1079 = vpop.permute.xlu0 %1078
      %v1081 = vsel %vm546, %v1077, 0
      %v1084 = vsel %vm609, %v1079, 0
      %1086 = vmatprep.subr.bf16.mxu0 0
      %1087 = vmatpush1.bf16.msra.mxu0 0
      %1088 = vmatprep.subr.bf16.mxu0 0
      %1089 = vmatpush1.bf16.msra.mxu0 0
      %1090 = vmatprep.subr.bf16.mxu0 0
      %1091 = vmatpush1.bf16.msra.mxu0 0
      %1092 = vmatprep.subr.bf16.mxu0 0
      %1093 = vmatpush1.bf16.msra.mxu0 0
      %1094 = vmatprep.subr.bf16.mxu0 0
      %1095 = vmatpush1.bf16.msra.mxu0 0
      %1096 = vmatprep.subr.bf16.mxu0 0
      %1097 = vmatpush1.bf16.msra.mxu0 0
      %1098 = vmatprep.subr.bf16.mxu0 0
      %1099 = vmatpush1.bf16.msra.mxu0 0
      %1100 = vmatprep.subr.bf16.mxu0 0
      %1101 = vmatpush1.bf16.msra.mxu0 %v1084
      %1102 = vmatprep.subr.bf16.mxu0 0
      %1103 = vmatpush2.bf16.msra.mxu0 0
      %1104 = vmatprep.subr.bf16.mxu0 0
      %1105 = vmatpush2.bf16.msra.mxu0 0
      %1106 = vmatprep.subr.bf16.mxu0 0
      %1107 = vmatpush2.bf16.msra.mxu0 0
      %1108 = vmatprep.subr.bf16.mxu0 0
      %1109 = vmatpush2.bf16.msra.mxu0 0
      %1110 = vmatprep.subr.bf16.mxu0 0
      %1111 = vmatpush2.bf16.msra.mxu0 0
      %1112 = vmatprep.subr.bf16.mxu0 0
      %1113 = vmatpush2.bf16.msra.mxu0 0
      %1114 = vmatprep.subr.bf16.mxu0 0
      %1115 = vmatpush2.bf16.msra.mxu0 0
      %1116 = vmatprep.subr.bf16.mxu0 0
      %1117 = vmatpush2.bf16.msra.mxu0 0
      %1118 = vmatprep.mubr.bf16.mxu0 0
      %1119 = vmatmul.mubr.bf16.gmra.mxu0 %v1081
      %v1120 = vpop.f32.mrf.mxu0
      %v1121 = vadd.f32 0.0, %v1120
      %v1122 = vpop.f32.mrf.mxu0
      %v1123 = vpop.f32.mrf.mxu0
      %v1124 = vpop.f32.mrf.mxu0
      %1125 = vdwg.mxu0
      %v1126 = vmul.f32 %v1121, %v1076
      %v1127 = vpack.c.bf16 %v1126, %v1126
      %v1129 = vsel %vm546, %v1127, 0
      %v1132 = vsel %vm609, %v542, 0
      %1134 = vmatprep.subr.bf16.mxu0 0
      %1135 = vmatpush1.bf16.msra.mxu0 0
      %1136 = vmatprep.subr.bf16.mxu0 0
      %1137 = vmatpush1.bf16.msra.mxu0 0
      %1138 = vmatprep.subr.bf16.mxu0 0
      %1139 = vmatpush1.bf16.msra.mxu0 0
      %1140 = vmatprep.subr.bf16.mxu0 0
      %1141 = vmatpush1.bf16.msra.mxu0 0
      %1142 = vmatprep.subr.bf16.mxu0 0
      %1143 = vmatpush1.bf16.msra.mxu0 0
      %1144 = vmatprep.subr.bf16.mxu0 0
      %1145 = vmatpush1.bf16.msra.mxu0 0
      %1146 = vmatprep.subr.bf16.mxu0 0
      %1147 = vmatpush1.bf16.msra.mxu0 0
      %1148 = vmatprep.subr.bf16.mxu0 0
      %1149 = vmatpush1.bf16.msra.mxu0 %v1132
      %1150 = vmatprep.subr.bf16.mxu0 0
      %1151 = vmatpush2.bf16.msra.mxu0 0
      %1152 = vmatprep.subr.bf16.mxu0 0
      %1153 = vmatpush2.bf16.msra.mxu0 0
      %1154 = vmatprep.subr.bf16.mxu0 0
      %1155 = vmatpush2.bf16.msra.mxu0 0
      %1156 = vmatprep.subr.bf16.mxu0 0
      %1157 = vmatpush2.bf16.msra.mxu0 0
      %1158 = vmatprep.subr.bf16.mxu0 0
      %1159 = vmatpush2.bf16.msra.mxu0 0
      %1160 = vmatprep.subr.bf16.mxu0 0
      %1161 = vmatpush2.bf16.msra.mxu0 0
      %1162 = vmatprep.subr.bf16.mxu0 0
      %1163 = vmatpush2.bf16.msra.mxu0 0
      %1164 = vmatprep.subr.bf16.mxu0 0
      %1165 = vmatpush2.bf16.msra.mxu0 0
      %1166 = vmatprep.mubr.bf16.mxu0 0
      %1167 = vmatmul.mubr.bf16.gmra.mxu0 %v1129
      %v1168 = vpop.f32.mrf.mxu0
      %v1169 = vadd.f32 0.0, %v1168
      %v1170 = vpop.f32.mrf.mxu0
      %v1171 = vpop.f32.mrf.mxu0
      %v1172 = vpop.f32.mrf.mxu0
      %1173 = vdwg.mxu0
      %v1174 = vadd.f32 %v1016, %v1169
      %v1175 = vld [vmem:[%s6] sm:$0x1]
      %v1177 = vlaneseq
      %v1178 = vshrl.u32 %v1177, 7
      %v1179 = vsub.s32 0, %v1178
      %v1180 = vrot.slane %v1175, %v1179
      %v1182 = vadd.f32 %v1174, %v1180
      %v1183 = vadd.f32 %v437, %v1182
      %v1184 = vld [vmem:[%s7] sm:$0x1]
      %v1185 = vld [vmem:[%s8] sm:$0x1]
      %v1186 = vsel %vm440, %v1183, 0.0
      %1187 = vadd.xlane.f32.xlu0 %v1186
      %v1188 = vpop.xlane.xlu0 %1187
      %v1189 = vmul.f32 %v1188, %v444
      %v1190 = vsub.f32 %v1183, %v1189
      %v1191 = vmul.f32 %v1190, %v1190
      %v1192 = vsel %vm440, %v1191, 0.0
      %1193 = vadd.xlane.f32.xlu0 %v1192
      %v1194 = vpop.xlane.xlu0 %1193
      %v1195 = vmul.f32 %v1194, %v444
      %v1196 = vadd.f32 %v1195, 1e-05
      %v1197 = vrsqrt.pop %v1196
      %v1198 = vmul.f32 %v1190, %v1197
      %v1200 = vlaneseq
      %v1201 = vshrl.u32 %v1200, 7
      %v1202 = vsub.s32 0, %v1201
      %v1203 = vrot.slane %v1184, %v1202
      %v1205 = vmul.f32 %v1198, %v1203
      %v1207 = vlaneseq
      %v1208 = vshrl.u32 %v1207, 7
      %v1209 = vsub.s32 0, %v1208
      %v1210 = vrot.slane %v1185, %v1209
      %v1212 = vadd.f32 %v1205, %v1210
      %v1213 = vpack.c.bf16 %v1212, %v1212
      %v1214 = vld [vmem:[%s9] sm:$0xf]
      %v1215 = vld [vmem:[%s9 + $0x4] sm:$0xf]
      %v1216 = vld [vmem:[%s9 + $0x8] sm:$0xf]
      %v1217 = vld [vmem:[%s9 + $0xc] sm:$0xf]
      %v1218 = vld [vmem:[%s10] sm:$0x1]
      %v1220 = vlaneseq
      %v1221 = vshrl.u32 %v1220, 7
      %v1222 = vsub.s32 0, %v1221
      %v1223 = vrot.slane %v1218, %v1222
      %v1229 = vunpack.c.l.b16 %v1214
      %v1230 = vunpack.c.l.b16 %v1215
      %v1231 = vunpack.c.l.b16 %v1216
      %v1232 = vunpack.c.l.b16 %v1217
      %v1233 = vpack.c.b16 %v1230, %v1229
      %v1234 = vpack.c.b16 %v1232, %v1231
      %v1238 = vsel %vm440, %v1213, 0
      %1240 = vmatprep.subr.bf16.mxu0 0
      %1241 = vmatpush1.bf16.msra.mxu0 0
      %1242 = vmatprep.subr.bf16.mxu0 0
      %1243 = vmatpush1.bf16.msra.mxu0 0
      %1244 = vmatprep.subr.bf16.mxu0 0
      %1245 = vmatpush1.bf16.msra.mxu0 0
      %1246 = vmatprep.subr.bf16.mxu0 0
      %1247 = vmatpush1.bf16.msra.mxu0 0
      %1248 = vmatprep.subr.bf16.mxu0 0
      %1249 = vmatpush1.bf16.msra.mxu0 0
      %1250 = vmatprep.subr.bf16.mxu0 0
      %1251 = vmatpush1.bf16.msra.mxu0 0
      %1252 = vmatprep.subr.bf16.mxu0 0
      %1253 = vmatpush1.bf16.msra.mxu0 %v1234
      %1254 = vmatprep.subr.bf16.mxu0 0
      %1255 = vmatpush1.bf16.msra.mxu0 %v1233
      %1256 = vmatprep.subr.bf16.mxu0 0
      %1257 = vmatpush2.bf16.msra.mxu0 0
      %1258 = vmatprep.subr.bf16.mxu0 0
      %1259 = vmatpush2.bf16.msra.mxu0 0
      %1260 = vmatprep.subr.bf16.mxu0 0
      %1261 = vmatpush2.bf16.msra.mxu0 0
      %1262 = vmatprep.subr.bf16.mxu0 0
      %1263 = vmatpush2.bf16.msra.mxu0 0
      %1264 = vmatprep.subr.bf16.mxu0 0
      %1265 = vmatpush2.bf16.msra.mxu0 0
      %1266 = vmatprep.subr.bf16.mxu0 0
      %1267 = vmatpush2.bf16.msra.mxu0 0
      %1268 = vmatprep.subr.bf16.mxu0 0
      %1269 = vmatpush2.bf16.msra.mxu0 0
      %1270 = vmatprep.subr.bf16.mxu0 0
      %1271 = vmatpush2.bf16.msra.mxu0 0
      %1272 = vmatprep.mubr.bf16.mxu0 0
      %1273 = vmatmul.mubr.bf16.gmra.mxu0 %v1238
      %v1274 = vpop.f32.mrf.mxu0
      %v1275 = vadd.f32 %v1223, %v1274
      %v1276 = vpop.f32.mrf.mxu0
      %v1277 = vpop.f32.mrf.mxu0
      %v1278 = vpop.f32.mrf.mxu0
      %1279 = vdwg.mxu0
      %v1280 = vmul.f32 %v1275, 1.702
      %v1281 = vxor.u32 %v1280, 2147483648
      %v1282 = vmul.f32 %v1281, 1.442695
      %v1283 = vpow.pop %v1282
      %v1284 = vadd.f32 %v1283, 1.0
      %v1285 = vrcp.pop %v1284
      %v1286 = vmul.f32 1.0, %v1285
      %v1287 = vmul.f32 %v1275, %v1286
      %v1288 = vpack.c.bf16 %v1287, %v1287
      %v1289 = vld [vmem:[%s11] sm:$0xf]
      %v1290 = vld [vmem:[%s11 + $0x4] sm:$0xf]
      %v1291 = vld [vmem:[%s11 + $0x8] sm:$0xf]
      %v1292 = vld [vmem:[%s11 + $0xc] sm:$0xf]
      %v1293 = vld [vmem:[%s11 + $0x10] sm:$0xf]
      %v1294 = vld [vmem:[%s11 + $0x14] sm:$0xf]
      %v1295 = vld [vmem:[%s11 + $0x18] sm:$0xf]
      %v1296 = vld [vmem:[%s11 + $0x1c] sm:$0xf]
      %v1297 = vld [vmem:[%s11 + $0x20] sm:$0xf]
      %v1298 = vld [vmem:[%s11 + $0x24] sm:$0xf]
      %v1299 = vld [vmem:[%s11 + $0x28] sm:$0xf]
      %v1300 = vld [vmem:[%s11 + $0x2c] sm:$0xf]
      %v1301 = vld [vmem:[%s11 + $0x30] sm:$0xf]
      %v1302 = vld [vmem:[%s11 + $0x34] sm:$0xf]
      %v1303 = vld [vmem:[%s11 + $0x38] sm:$0xf]
      %v1304 = vld [vmem:[%s11 + $0x3c] sm:$0xf]
      %v1305 = vld [vmem:[%s12] sm:$0x1]
      %v1307 = vlaneseq
      %v1308 = vshrl.u32 %v1307, 7
      %v1309 = vsub.s32 0, %v1308
      %v1310 = vrot.slane %v1305, %v1309
      %v1328 = vunpack.c.l.b16 %v1289
      %v1329 = vunpack.c.l.b16 %v1290
      %v1330 = vunpack.c.l.b16 %v1291
      %v1331 = vunpack.c.l.b16 %v1292
      %v1332 = vunpack.c.l.b16 %v1293
      %v1333 = vunpack.c.l.b16 %v1294
      %v1334 = vunpack.c.l.b16 %v1295
      %v1335 = vunpack.c.l.b16 %v1296
      %v1336 = vunpack.c.l.b16 %v1297
      %v1337 = vunpack.c.l.b16 %v1298
      %v1338 = vunpack.c.l.b16 %v1299
      %v1339 = vunpack.c.l.b16 %v1300
      %v1340 = vunpack.c.l.b16 %v1301
      %v1341 = vunpack.c.l.b16 %v1302
      %v1342 = vunpack.c.l.b16 %v1303
      %v1343 = vunpack.c.l.b16 %v1304
      %v1344 = vpack.c.b16 %v1329, %v1328
      %v1345 = vpack.c.b16 %v1331, %v1330
      %v1346 = vpack.c.b16 %v1333, %v1332
      %v1347 = vpack.c.b16 %v1335, %v1334
      %v1348 = vpack.c.b16 %v1337, %v1336
      %v1349 = vpack.c.b16 %v1339, %v1338
      %v1350 = vpack.c.b16 %v1341, %v1340
      %v1351 = vpack.c.b16 %v1343, %v1342
      %1360 = vmatprep.subr.bf16.mxu0 0
      %1361 = vmatpush1.bf16.msra.mxu0 %v1351
      %1362 = vmatprep.subr.bf16.mxu0 0
      %1363 = vmatpush1.bf16.msra.mxu0 %v1350
      %1364 = vmatprep.subr.bf16.mxu0 0
      %1365 = vmatpush1.bf16.msra.mxu0 %v1349
      %1366 = vmatprep.subr.bf16.mxu0 0
      %1367 = vmatpush1.bf16.msra.mxu0 %v1348
      %1368 = vmatprep.subr.bf16.mxu0 0
      %1369 = vmatpush1.bf16.msra.mxu0 %v1347
      %1370 = vmatprep.subr.bf16.mxu0 0
      %1371 = vmatpush1.bf16.msra.mxu0 %v1346
      %1372 = vmatprep.subr.bf16.mxu0 0
      %1373 = vmatpush1.bf16.msra.mxu0 %v1345
      %1374 = vmatprep.subr.bf16.mxu0 0
      %1375 = vmatpush1.bf16.msra.mxu0 %v1344
      %1376 = vmatprep.subr.bf16.mxu0 0
      %1377 = vmatpush2.bf16.msra.mxu0 0
      %1378 = vmatprep.subr.bf16.mxu0 0
      %1379 = vmatpush2.bf16.msra.mxu0 0
      %1380 = vmatprep.subr.bf16.mxu0 0
      %1381 = vmatpush2.bf16.msra.mxu0 0
      %1382 = vmatprep.subr.bf16.mxu0 0
      %1383 = vmatpush2.bf16.msra.mxu0 0
      %1384 = vmatprep.subr.bf16.mxu0 0
      %1385 = vmatpush2.bf16.msra.mxu0 0
      %1386 = vmatprep.subr.bf16.mxu0 0
      %1387 = vmatpush2.bf16.msra.mxu0 0
      %1388 = vmatprep.subr.bf16.mxu0 0
      %1389 = vmatpush2.bf16.msra.mxu0 0
      %1390 = vmatprep.subr.bf16.mxu0 0
      %1391 = vmatpush2.bf16.msra.mxu0 0
      %1392 = vmatprep.mubr.bf16.mxu0 0
      %1393 = vmatmul.mubr.bf16.gmra.mxu0 %v1288
      %v1394 = vpop.f32.mrf.mxu0
      %v1395 = vadd.f32 %v1310, %v1394
      %v1396 = vpop.f32.mrf.mxu0
      %v1397 = vpop.f32.mrf.mxu0
      %v1398 = vpop.f32.mrf.mxu0
      %1399 = vdwg.mxu0
      %v1400 = vadd.f32 %v1183, %v1395
      %1401 = vst.msk [vmem:[%s435] sm:$0xff] %vm440, %v1400
      %p1402 = scmp.lt.s32.totalorder %s24, 1
      %s1403 = scalar_select %p1402, %s24, 1
      %s1404 = smul.addr %s1403, 8
      %s1405 = scalar_lea.vmem %s13, %s1404
      // Predicated region
      $region73: #{residual_attention_block.1} parent=71 // pred_check
        %p1406 = pneg %p320
      $region74: #{residual_attention_block.1} parent=71 // pred_check_branch
        %1408 = sbr.rel (%p1406) target = $region76
      $region75: #{residual_attention_block.1} parent=71 // pred_region
        _
      $region76: #{residual_attention_block.1} parent=71 // pred_fallthru
        _
    $region72: #{residual_attention_block.1} parent=5 // pred_fallthru
      _
    %p1409 = scmp.le.s32.totalorder 2, %s19
    // Predicated region
    $region77: #{residual_attention_block.1} parent=5 // pred_check
      %p1410 = pneg %p1409
    $region78: #{residual_attention_block.1} parent=5 // pred_check_branch
      %1412 = sbr.rel (%p1410) target = $region80
    $region79: #{residual_attention_block.1} parent=5 // pred_region
      %s1413 = ssub.s32 %s19, 2
      // Predicated region
      $region81: #{residual_attention_block.1} parent=79 // pred_check
        %p1414 = pneg %p326
      $region82: #{residual_attention_block.1} parent=79 // pred_check_branch
        %1416 = sbr.rel (%p1414) target = $region84
      $region83: #{residual_attention_block.1} parent=79 // pred_region
        %p1417 = scmp.lt.s32.totalorder %s25, 1
        %s1418 = scalar_select %p1417, %s25, 1
        %s1419 = smul.addr %s1418, 8
        %s1420 = scalar_lea.vmem %s13, %s1419
      $region84: #{residual_attention_block.1} parent=79 // pred_fallthru
        _
    $region80: #{residual_attention_block.1} parent=5 // pred_fallthru
      _
  $region6: #{residual_attention_block.1} parent=0 // loop_footer
    %s23 = sadd.s32 1, %s19
  $region7: #{residual_attention_block.1} parent=0 // loop_footer_branch
    %18 = sbr.rel target = $region3
  $region8: #{residual_attention_block.1} parent=0 // loop_exit
    _

</llo_original>
